<compile_context>
chip_gen: v7x
topology: tpu7x:2x2x1
jax: 0.10.0
libtpu: 0.0.40
codegen_flags: <defaults>
</compile_context>

<pallas_src>
from functools import partial

import jax
import jax.numpy as jnp
from jax import lax
from jax.experimental import pallas as pl
from jax.experimental.pallas import tpu as pltpu


# ----------------------------- Pallas kernel -------------------------------

def _convlstm_kernel(xh_ref, state_ref, wc_ref, w_ref, b_ref, out_ref, *, ch):
    # One lane-dense MXU matmul covers all 8 convolutions at once:
    #   pre = im2col(pad([x | h0])) @ W + b        -> (TM, 4*Ch), cols [i|f|g|o]
    pre = (jnp.dot(xh_ref[...], w_ref[...], preferred_element_type=jnp.float32)
           + b_ref[...])

    c0 = state_ref[:, :ch]
    h0 = state_ref[:, ch:]
    wci = wc_ref[:, :ch]
    wcf = wc_ref[:, ch:2 * ch]
    wco = wc_ref[:, 2 * ch:]

    def sigmoid(z):
        # exp + approx reciprocal both run on the EUP slot (no VPU divide).
        return pl.reciprocal(1.0 + jnp.exp(-z), approx=True)

    i = sigmoid(pre[:, :ch] + c0 * wci)
    f = sigmoid(pre[:, ch:2 * ch] + c0 * wcf)
    g = jnp.tanh(pre[:, 2 * ch:3 * ch])
    c_t = c0 + f * c0 + i * g
    o = sigmoid(pre[:, 3 * ch:] + c_t * wco)
    h_t = h0 + o * jnp.tanh(c_t)

    # Lane-dense 128-wide store: [o | h_t | c_t | pad] (pad sliced off in wrapper).
    out_ref[...] = jnp.concatenate([o, h_t, c_t, jnp.zeros_like(o)], axis=-1)


# ------------------------------- wrapper ------------------------------------

def _im2col3x3(x_pad_nhwc):
    """(N, H+2, W+2, C) -> (N*H*W, 9*C) with tap-major, channel-minor columns."""
    N, Hp, Wp, C = x_pad_nhwc.shape
    H, W = Hp - 2, Wp - 2
    cols = [x_pad_nhwc[:, dy:dy + H, dx:dx + W, :]
            for dy in range(3) for dx in range(3)]
    return jnp.concatenate(cols, axis=-1).reshape(N * H * W, 9 * C)


def _pick_block_rows(T, cap=1024):
    for tm in (cap, 512, 256, 128, 64, 32, 16, 8):
        if tm <= T and T % tm == 0:
            return tm
    return T  # fall back to a single full block


def convlstm_res_forward(x_nchw, hidden_state, params):
    """Mirror of ConvLSTM_res.forward (eval semantics). Returns (o, hidden_out)."""
    N, Cin, H, W = x_nchw.shape
    Ch = params["wh_i"].shape[-1]
    T = N * H * W
    Cx = Cin + Ch

    h0 = hidden_state[:, 0]                                  # (N, Ch, H, W)
    c0 = hidden_state[:, 1]

    # --- layout plumbing (wrapper side): NCHW -> NHWC, reflect pad, im2col ---
    x_nhwc = jnp.transpose(x_nchw, (0, 2, 3, 1)).astype(jnp.float32)
    h0_nhwc = jnp.transpose(h0, (0, 2, 3, 1)).astype(jnp.float32)
    c0_nhwc = jnp.transpose(c0, (0, 2, 3, 1)).astype(jnp.float32)

    xh_nhwc = jnp.concatenate([x_nhwc, h0_nhwc], axis=-1)    # (N, H, W, Cin+Ch)
    xh_pad = jnp.pad(xh_nhwc, ((0, 0), (1, 1), (1, 1), (0, 0)), mode="reflect")
    xh_col = _im2col3x3(xh_pad)                              # (T, 9*(Cin+Ch))

    # packed state (c0 | h0) and packed per-pixel peephole weights (Wci|Wcf|Wco)
    state2d = jnp.concatenate(
        [c0_nhwc.reshape(T, Ch), h0_nhwc.reshape(T, Ch)], axis=-1)          # (T, 2*Ch)
    wc_pix = jnp.concatenate(
        [params["wc_i"].reshape(H * W, Ch),
         params["wc_f"].reshape(H * W, Ch),
         params["wc_o"].reshape(H * W, Ch)], axis=-1)                       # (H*W, 3*Ch)
    wc2d = jnp.tile(wc_pix, (N, 1))                                         # (T, 3*Ch)

    # Pack all 8 conv kernels into ONE weight matrix:
    #   rows tap-major / channel-minor with x-channels first, h-channels second
    #   (matches the im2col column layout of the concatenated [x | h0] tensor),
    #   columns [i | f | g | o].
    Wx = jnp.concatenate([params["wx_i"], params["wx_f"],
                          params["wx_g"], params["wx_o"]], axis=-1)          # (3,3,Cin,4Ch)
    Wh = jnp.concatenate([params["wh_i"], params["wh_f"],
                          params["wh_g"], params["wh_o"]], axis=-1)          # (3,3,Ch,4Ch)
    Wfull = jnp.concatenate([Wx, Wh], axis=2).reshape(9 * Cx, 4 * Ch)        # (9*(Cin+Ch),4Ch)
    b = jnp.concatenate([params["bx_i"] + params["bh_i"],
                         params["bx_f"] + params["bh_f"],
                         params["bx_g"] + params["bh_g"],
                         params["bx_o"] + params["bh_o"]]).reshape(1, 4 * Ch)

    TM = _pick_block_rows(T)
    grid = (T // TM,)

    out2d = pl.pallas_call(
        partial(_convlstm_kernel, ch=Ch),
        out_shape=jax.ShapeDtypeStruct((T, 4 * Ch), jnp.float32),
        grid=grid,
        in_specs=[
            pl.BlockSpec((TM, 9 * Cx), lambda i: (i, 0)),       # im2col([x|h0])
            pl.BlockSpec((TM, 2 * Ch), lambda i: (i, 0)),       # [c0 | h0]
            pl.BlockSpec((TM, 3 * Ch), lambda i: (i, 0)),       # [Wci|Wcf|Wco]
            pl.BlockSpec((9 * Cx, 4 * Ch), lambda i: (0, 0)),   # packed conv weights
            pl.BlockSpec((1, 4 * Ch), lambda i: (0, 0)),        # bias
        ],
        out_specs=pl.BlockSpec((TM, 4 * Ch), lambda i: (i, 0)),
        compiler_params=pltpu.CompilerParams(
            dimension_semantics=("parallel",)),
    )(xh_col, state2d, wc2d, Wfull, b)

    o2d = out2d[:, :Ch]
    h2d = out2d[:, Ch:2 * Ch]
    c2d = out2d[:, 2 * Ch:3 * Ch]

    def to_nchw(t2d):
        return jnp.transpose(t2d.reshape(N, H, W, Ch), (0, 3, 1, 2))

    o = to_nchw(o2d)
    h_t = to_nchw(h2d)
    c_t = to_nchw(c2d)
    hidden_out = jnp.stack([h_t, c_t], axis=1)
    return o, hidden_out


# ------------------------------ parameters -----------------------------------

def init_params(key, input_size, hidden_size, width):
    """Random params. Conv weights stored HWIO; peephole weights stored (H, W, Ch).
    (PyTorch initializes the peephole Wc_* to zero; we use small random values so
    that data path is actually exercised in the check.)"""
    ks = jax.random.split(key, 20)

    def w(k, shape, scale):
        return (scale * jax.random.normal(k, shape)).astype(jnp.float32)

    Cin, Ch, Wd = input_size, hidden_size, width
    p = {}
    idx = 0
    for name in ("i", "f", "g", "o"):
        p[f"wx_{name}"] = w(ks[idx], (3, 3, Cin, Ch), 0.15); idx += 1
        p[f"wh_{name}"] = w(ks[idx], (3, 3, Ch, Ch), 0.08); idx += 1
        p[f"bx_{name}"] = w(ks[idx], (Ch,), 0.05); idx += 1
        p[f"bh_{name}"] = w(ks[idx], (Ch,), 0.05); idx += 1
    p["wc_i"] = w(ks[16], (Wd, Wd, Ch), 0.1)
    p["wc_f"] = w(ks[17], (Wd, Wd, Ch), 0.1)
    p["wc_o"] = w(ks[18], (Wd, Wd, Ch), 0.1)
    return p


# ------------------------------ reference ------------------------------------

def _reference(x_nchw, hidden_state, p):
    """Pure-JAX mirror of the PyTorch ConvLSTM_res.forward for verification."""
    h0 = hidden_state[:, 0]
    c0 = hidden_state[:, 1]

    def pad(t):  # ReflectionPad2d(1) on NCHW
        return jnp.pad(t, ((0, 0), (0, 0), (1, 1), (1, 1)), mode="reflect")

    def conv(t_pad_nchw, w_hwio, bias):
        y = lax.conv_general_dilated(
            jnp.transpose(t_pad_nchw, (0, 2, 3, 1)), w_hwio,
            window_strides=(1, 1), padding="VALID",
            dimension_numbers=("NHWC", "HWIO", "NHWC"))
        return jnp.transpose(y + bias, (0, 3, 1, 2))

    def sig(z):
        return 1.0 / (1.0 + jnp.exp(-z))

    def wc(name):  # (H, W, Ch) -> (1, Ch, H, W)
        return jnp.transpose(p[name], (2, 0, 1))[None]

    xp, hp = pad(x_nchw), pad(h0)
    i = sig(conv(xp, p["wx_i"], p["bx_i"]) + conv(hp, p["wh_i"], p["bh_i"]) + c0 * wc("wc_i"))
    f = sig(conv(xp, p["wx_f"], p["bx_f"]) + conv(hp, p["wh_f"], p["bh_f"]) + c0 * wc("wc_f"))
    g = jnp.tanh(conv(xp, p["wx_g"], p["bx_g"]) + conv(hp, p["wh_g"], p["bh_g"]))
    c_t = c0 + f * c0 + i * g
    o = sig(conv(xp, p["wx_o"], p["bx_o"]) + conv(hp, p["wh_o"], p["bh_o"]) + c_t * wc("wc_o"))
    h_t = h0 + o * jnp.tanh(c_t)
    return o, jnp.stack([h_t, c_t], axis=1)


# --------------------------------- main ---------------------------------------

if __name__ == "__main__":
    input_size, hidden_size, width = 4, 32, 8   # matches the module's defaults (width=8)
    N = 2

    key = jax.random.PRNGKey(0)
    kp, kx, kh = jax.random.split(key, 3)
    params = init_params(kp, input_size, hidden_size, width)
    x = jax.random.normal(kx, (N, input_size, width, width), dtype=jnp.float32)
    hidden = 0.5 * jax.random.normal(kh, (N, 2, hidden_size, width, width), dtype=jnp.float32)

    o, hidden_out = convlstm_res_forward(x, hidden, params)
    o = jax.block_until_ready(o)
    hidden_out = jax.block_until_ready(hidden_out)

    assert o.shape == (N, hidden_size, width, width), o.shape
    assert hidden_out.shape == (N, 2, hidden_size, width, width), hidden_out.shape

    o_ref, hidden_ref = _reference(x, hidden, params)
    err_o = float(jnp.max(jnp.abs(o - o_ref)))
    err_h = float(jnp.max(jnp.abs(hidden_out - hidden_ref)))
    assert err_o < 1e-2 and err_h < 1e-2, (err_o, err_h)

    print("KERNEL_OK")
</pallas_src>

<mosaic_0001>
module attributes {stable_mosaic.version = 11 : i64} {
  func.func @_convlstm_kernel(%arg0: i32, %arg1: memref<128x324xf32, #tpu.memory_space<vmem>>, %arg2: memref<128x64xf32, #tpu.memory_space<vmem>>, %arg3: memref<128x96xf32, #tpu.memory_space<vmem>>, %arg4: memref<324x128xf32, #tpu.memory_space<vmem>>, %arg5: memref<1x128xf32, #tpu.memory_space<vmem>>, %arg6: memref<128x128xf32, #tpu.memory_space<vmem>>) attributes {dimension_semantics = [#tpu.dimension_semantics<parallel>], iteration_bounds = array<i64: 1>, scalar_prefetch = 0 : i64, scratch_operands = 0 : i64, tpu.core_type = #tpu.core_type<tc>, window_params = [{transform_indices = @transform_0, window_bounds = array<i64: 128, 324>}, {transform_indices = @transform_1, window_bounds = array<i64: 128, 64>}, {transform_indices = @transform_2, window_bounds = array<i64: 128, 96>}, {pipeline_mode = #tpu.pipeline_mode<synchronous>, transform_indices = @transform_3, window_bounds = array<i64: 324, 128>}, {pipeline_mode = #tpu.pipeline_mode<synchronous>, transform_indices = @transform_4, window_bounds = array<i64: 1, 128>}, {transform_indices = @transform_5, window_bounds = array<i64: 128, 128>}]} {
    %c0 = arith.constant 0 : index
    %c0_0 = arith.constant 0 : index
    %0 = vector.load %arg1[%c0, %c0_0] : memref<128x324xf32, #tpu.memory_space<vmem>>, vector<128x324xf32>
    %c0_1 = arith.constant 0 : index
    %c0_2 = arith.constant 0 : index
    %1 = vector.load %arg4[%c0_1, %c0_2] : memref<324x128xf32, #tpu.memory_space<vmem>>, vector<324x128xf32>
    %cst = arith.constant dense<0.000000e+00> : vector<128x128xf32>
    %2 = tpu.matmul %0, %1, %cst {dimension_numbers = #tpu.dot_dimension_numbers<[1], [0], [0], [1], [0, 0, 1, 1], [], []>} : vector<128x324xf32>, vector<324x128xf32>, vector<128x128xf32> -> vector<128x128xf32>
    %c0_3 = arith.constant 0 : index
    %c0_4 = arith.constant 0 : index
    %3 = vector.load %arg5[%c0_3, %c0_4] : memref<1x128xf32, #tpu.memory_space<vmem>>, vector<1x128xf32>
    %4 = vector.broadcast %3 : vector<1x128xf32> to vector<128x128xf32>
    %5 = arith.addf %2, %4 : vector<128x128xf32>
    %c0_5 = arith.constant 0 : index
    %c0_6 = arith.constant 0 : index
    %6 = vector.load %arg2[%c0_5, %c0_6] : memref<128x64xf32, #tpu.memory_space<vmem>>, vector<128x32xf32>
    %c0_7 = arith.constant 0 : index
    %c32 = arith.constant 32 : index
    %7 = vector.load %arg2[%c0_7, %c32] : memref<128x64xf32, #tpu.memory_space<vmem>>, vector<128x32xf32>
    %c0_8 = arith.constant 0 : index
    %c0_9 = arith.constant 0 : index
    %8 = vector.load %arg3[%c0_8, %c0_9] : memref<128x96xf32, #tpu.memory_space<vmem>>, vector<128x32xf32>
    %c0_10 = arith.constant 0 : index
    %c32_11 = arith.constant 32 : index
    %9 = vector.load %arg3[%c0_10, %c32_11] : memref<128x96xf32, #tpu.memory_space<vmem>>, vector<128x32xf32>
    %c0_12 = arith.constant 0 : index
    %c64 = arith.constant 64 : index
    %10 = vector.load %arg3[%c0_12, %c64] : memref<128x96xf32, #tpu.memory_space<vmem>>, vector<128x32xf32>
    %11 = vector.extract_strided_slice %5 {offsets = [0, 0], sizes = [128, 32], strides = [1, 1]} : vector<128x128xf32> to vector<128x32xf32>
    %12 = arith.mulf %6, %8 : vector<128x32xf32>
    %13 = arith.addf %11, %12 : vector<128x32xf32>
    %cst_13 = arith.constant 0.000000e+00 : f32
    %14 = vector.broadcast %cst_13 : f32 to vector<128x32xf32>
    %15 = arith.subf %14, %13 : vector<128x32xf32>
    %16 = math.exp %15 : vector<128x32xf32>
    %cst_14 = arith.constant 1.000000e+00 : f32
    %17 = vector.broadcast %cst_14 : f32 to vector<128x32xf32>
    %18 = arith.addf %17, %16 : vector<128x32xf32>
    %19 = tpu.reciprocal %18 {approx = true} : vector<128x32xf32> -> vector<128x32xf32>
    %20 = vector.extract_strided_slice %5 {offsets = [0, 32], sizes = [128, 32], strides = [1, 1]} : vector<128x128xf32> to vector<128x32xf32>
    %21 = arith.mulf %6, %9 : vector<128x32xf32>
    %22 = arith.addf %20, %21 : vector<128x32xf32>
    %cst_15 = arith.constant 0.000000e+00 : f32
    %23 = vector.broadcast %cst_15 : f32 to vector<128x32xf32>
    %24 = arith.subf %23, %22 : vector<128x32xf32>
    %25 = math.exp %24 : vector<128x32xf32>
    %cst_16 = arith.constant 1.000000e+00 : f32
    %26 = vector.broadcast %cst_16 : f32 to vector<128x32xf32>
    %27 = arith.addf %26, %25 : vector<128x32xf32>
    %28 = tpu.reciprocal %27 {approx = true} : vector<128x32xf32> -> vector<128x32xf32>
    %29 = vector.extract_strided_slice %5 {offsets = [0, 64], sizes = [128, 32], strides = [1, 1]} : vector<128x128xf32> to vector<128x32xf32>
    %30 = math.tanh %29 : vector<128x32xf32>
    %31 = arith.mulf %28, %6 : vector<128x32xf32>
    %32 = arith.addf %6, %31 : vector<128x32xf32>
    %33 = arith.mulf %19, %30 : vector<128x32xf32>
    %34 = arith.addf %32, %33 : vector<128x32xf32>
    %35 = vector.extract_strided_slice %5 {offsets = [0, 96], sizes = [128, 32], strides = [1, 1]} : vector<128x128xf32> to vector<128x32xf32>
    %36 = arith.mulf %34, %10 : vector<128x32xf32>
    %37 = arith.addf %35, %36 : vector<128x32xf32>
    %cst_17 = arith.constant 0.000000e+00 : f32
    %38 = vector.broadcast %cst_17 : f32 to vector<128x32xf32>
    %39 = arith.subf %38, %37 : vector<128x32xf32>
    %40 = math.exp %39 : vector<128x32xf32>
    %cst_18 = arith.constant 1.000000e+00 : f32
    %41 = vector.broadcast %cst_18 : f32 to vector<128x32xf32>
    %42 = arith.addf %41, %40 : vector<128x32xf32>
    %43 = tpu.reciprocal %42 {approx = true} : vector<128x32xf32> -> vector<128x32xf32>
    %44 = math.tanh %34 : vector<128x32xf32>
    %45 = arith.mulf %43, %44 : vector<128x32xf32>
    %46 = arith.addf %7, %45 : vector<128x32xf32>
    %cst_19 = arith.constant 0.000000e+00 : f32
    %47 = vector.broadcast %cst_19 : f32 to vector<128x32xf32>
    %48 = tpu.concatenate %43, %46, %34, %47 in 1 : vector<128x32xf32>, vector<128x32xf32>, vector<128x32xf32>, vector<128x32xf32> -> vector<128x128xf32>
    %c0_20 = arith.constant 0 : index
    %c0_21 = arith.constant 0 : index
    %49 = vector.load %arg6[%c0_20, %c0_21] : memref<128x128xf32, #tpu.memory_space<vmem>>, vector<128x128xf32>
    tpu.vector_store %arg6[%c0_20, %c0_21], %48 {strides = array<i32>} : memref<128x128xf32, #tpu.memory_space<vmem>>, vector<128x128xf32>,
    return
  }
  func.func @transform_0(%arg0: i32) -> (i32, i32) {
    %c0_i32 = arith.constant 0 : i32
    %c0_i32_0 = arith.constant 0 : i32
    return %arg0, %c0_i32 : i32, i32
  }
  func.func @transform_1(%arg0: i32) -> (i32, i32) {
    %c0_i32 = arith.constant 0 : i32
    %c0_i32_0 = arith.constant 0 : i32
    return %arg0, %c0_i32 : i32, i32
  }
  func.func @transform_2(%arg0: i32) -> (i32, i32) {
    %c0_i32 = arith.constant 0 : i32
    %c0_i32_0 = arith.constant 0 : i32
    return %arg0, %c0_i32 : i32, i32
  }
  func.func @transform_3(%arg0: i32) -> (i32, i32) {
    %c0_i32 = arith.constant 0 : i32
    %c0_i32_0 = arith.constant 0 : i32
    %c0_i32_1 = arith.constant 0 : i32
    return %c0_i32, %c0_i32_0 : i32, i32
  }
  func.func @transform_4(%arg0: i32) -> (i32, i32) {
    %c0_i32 = arith.constant 0 : i32
    %c0_i32_0 = arith.constant 0 : i32
    %c0_i32_1 = arith.constant 0 : i32
    return %c0_i32, %c0_i32_0 : i32, i32
  }
  func.func @transform_5(%arg0: i32) -> (i32, i32) {
    %c0_i32 = arith.constant 0 : i32
    %c0_i32_0 = arith.constant 0 : i32
    return %arg0, %c0_i32 : i32, i32
  }
}

</mosaic_0001>

<llo_original>
// kernel: tpu_custom_call.1
$region0: #{tpu_custom_call.1}
  #allocation0 [shape = 'u32[]', space=smem, size = 0x4, offset = 0x4, fixed_abs, tag = 'smem constant byte address 0x4 - core index']
  #allocation1 [shape = 'u32[144,128]{1,0:T(1,128)}', space=vmem, size = 0x12000, scoped, tag = 'internal scratch']
  %s0 = inlined_call_operand.vmem [shape: f32[128,324], index: 0, kind: input, shape index: {}]
  %s1 = inlined_call_operand.vmem [shape: f32[128,64], index: 1, kind: input, shape index: {}]
  %s2 = inlined_call_operand.vmem [shape: f32[128,96], index: 2, kind: input, shape index: {}]
  %s3 = inlined_call_operand.vmem [shape: f32[324,128], index: 3, kind: input, shape index: {}]
  %s4 = inlined_call_operand.vmem [shape: f32[1,128], index: 4, kind: input, shape index: {}]
  %s5 = inlined_call_operand.hbm [shape: f32[128,128], index: 5, kind: output, shape index: {}]
  %s6 = sld [smem:[#allocation0]]
  $region30: #{tpu_custom_call.1} parent=0
    _
  %s8 = ssub.s32 1, %s6
  %s9 = scalar_select 0, %s8, %s6
  $region1: #{tpu_custom_call.1} parent=0
    #allocation2 [shape = 'u8[65536]{0}', space=vmem, size = 0x10000, scoped, tag = 'output window, operand 0, single buffered']
    #allocation3 [shape = 's32[1]{0}', space=sflag, size = 0x4, scoped, tag = 'scoped memory for tpu_custom_call.1']
    %10 = vsyncpa [#allocation3], 0
    // Predicated region
    $region2: #{tpu_custom_call.1} parent=1 // pred_check
      _
    $region3: #{tpu_custom_call.1} parent=1 // pred_check_branch
      %12 = sbr.rel (0) target = $region5
    $region4: #{tpu_custom_call.1} parent=1 // pred_region
      _
    $region5: #{tpu_custom_call.1} parent=1 // pred_fallthru
      _
    // Predicated region
    $region6: #{tpu_custom_call.1} parent=1 // pred_check
      _
    $region7: #{tpu_custom_call.1} parent=1 // pred_check_branch
      %14 = sbr.rel (0) target = $region9
    $region8: #{tpu_custom_call.1} parent=1 // pred_region
      _
    $region9: #{tpu_custom_call.1} parent=1 // pred_fallthru
      _
    // Predicated region
    $region10: #{tpu_custom_call.1} parent=1 // pred_check
      _
    $region11: #{tpu_custom_call.1} parent=1 // pred_check_branch
      %16 = sbr.rel (0) target = $region13
    $region12: #{tpu_custom_call.1} parent=1 // pred_region
      _
    $region13: #{tpu_custom_call.1} parent=1 // pred_fallthru
      _
    // Predicated region
    $region14: #{tpu_custom_call.1} parent=1 // pred_check
      _
    $region15: #{tpu_custom_call.1} parent=1 // pred_check_branch
      %18 = sbr.rel (0) target = $region17
    $region16: #{tpu_custom_call.1} parent=1 // pred_region
      _
    $region17: #{tpu_custom_call.1} parent=1 // pred_fallthru
      _
    // Predicated region
    $region18: #{tpu_custom_call.1} parent=1 // pred_check
      _
    $region19: #{tpu_custom_call.1} parent=1 // pred_check_branch
      %20 = sbr.rel (0) target = $region21
    $region20: #{tpu_custom_call.1} parent=1 // pred_region
      _
    $region21: #{tpu_custom_call.1} parent=1 // pred_fallthru
      _
    %v21 = vld [vmem:[%s0] sm:$0xff]
    %v22 = vld [vmem:[%s0 + $0x8] sm:$0xff]
    %v23 = vld [vmem:[%s0 + $0x10] sm:$0xff]
    %v24 = vld [vmem:[%s0 + $0x18] sm:$0xff]
    %v25 = vld [vmem:[%s0 + $0x20] sm:$0xff]
    %v26 = vld [vmem:[%s0 + $0x28] sm:$0xff]
    %v27 = vld [vmem:[%s0 + $0x30] sm:$0xff]
    %v28 = vld [vmem:[%s0 + $0x38] sm:$0xff]
    %v29 = vld [vmem:[%s0 + $0x40] sm:$0xff]
    %v30 = vld [vmem:[%s0 + $0x48] sm:$0xff]
    %v31 = vld [vmem:[%s0 + $0x50] sm:$0xff]
    %v32 = vld [vmem:[%s0 + $0x58] sm:$0xff]
    %v33 = vld [vmem:[%s0 + $0x60] sm:$0xff]
    %v34 = vld [vmem:[%s0 + $0x68] sm:$0xff]
    %v35 = vld [vmem:[%s0 + $0x70] sm:$0xff]
    %v36 = vld [vmem:[%s0 + $0x78] sm:$0xff]
    %v37 = vld [vmem:[%s0 + $0x80] sm:$0xff]
    %v38 = vld [vmem:[%s0 + $0x88] sm:$0xff]
    %v39 = vld [vmem:[%s0 + $0x90] sm:$0xff]
    %v40 = vld [vmem:[%s0 + $0x98] sm:$0xff]
    %v41 = vld [vmem:[%s0 + $0xa0] sm:$0xff]
    %v42 = vld [vmem:[%s0 + $0xa8] sm:$0xff]
    %v43 = vld [vmem:[%s0 + $0xb0] sm:$0xff]
    %v44 = vld [vmem:[%s0 + $0xb8] sm:$0xff]
    %v45 = vld [vmem:[%s0 + $0xc0] sm:$0xff]
    %v46 = vld [vmem:[%s0 + $0xc8] sm:$0xff]
    %v47 = vld [vmem:[%s0 + $0xd0] sm:$0xff]
    %v48 = vld [vmem:[%s0 + $0xd8] sm:$0xff]
    %v49 = vld [vmem:[%s0 + $0xe0] sm:$0xff]
    %v50 = vld [vmem:[%s0 + $0xe8] sm:$0xff]
    %v51 = vld [vmem:[%s0 + $0xf0] sm:$0xff]
    %v52 = vld [vmem:[%s0 + $0xf8] sm:$0xff]
    %v53 = vld [vmem:[%s0 + $0x100] sm:$0xff]
    %v54 = vld [vmem:[%s0 + $0x108] sm:$0xff]
    %v55 = vld [vmem:[%s0 + $0x110] sm:$0xff]
    %v56 = vld [vmem:[%s0 + $0x118] sm:$0xff]
    %v57 = vld [vmem:[%s0 + $0x120] sm:$0xff]
    %v58 = vld [vmem:[%s0 + $0x128] sm:$0xff]
    %v59 = vld [vmem:[%s0 + $0x130] sm:$0xff]
    %v60 = vld [vmem:[%s0 + $0x138] sm:$0xff]
    %v61 = vld [vmem:[%s0 + $0x140] sm:$0xff]
    %v62 = vld [vmem:[%s0 + $0x148] sm:$0xff]
    %v63 = vld [vmem:[%s0 + $0x150] sm:$0xff]
    %v64 = vld [vmem:[%s0 + $0x158] sm:$0xff]
    %v65 = vld [vmem:[%s0 + $0x160] sm:$0xff]
    %v66 = vld [vmem:[%s0 + $0x168] sm:$0xff]
    %v67 = vld [vmem:[%s0 + $0x170] sm:$0xff]
    %v68 = vld [vmem:[%s0 + $0x178] sm:$0xff]
    %v69 = vld [vmem:[%s3] sm:$0xff]
    %v70 = vld [vmem:[%s3 + $0x8] sm:$0xff]
    %v71 = vld [vmem:[%s3 + $0x10] sm:$0xff]
    %v72 = vld [vmem:[%s3 + $0x18] sm:$0xff]
    %v73 = vld [vmem:[%s3 + $0x20] sm:$0xff]
    %v74 = vld [vmem:[%s3 + $0x28] sm:$0xff]
    %v75 = vld [vmem:[%s3 + $0x30] sm:$0xff]
    %v76 = vld [vmem:[%s3 + $0x38] sm:$0xff]
    %v77 = vld [vmem:[%s3 + $0x40] sm:$0xff]
    %v78 = vld [vmem:[%s3 + $0x48] sm:$0xff]
    %v79 = vld [vmem:[%s3 + $0x50] sm:$0xff]
    %v80 = vld [vmem:[%s3 + $0x58] sm:$0xff]
    %v81 = vld [vmem:[%s3 + $0x60] sm:$0xff]
    %v82 = vld [vmem:[%s3 + $0x68] sm:$0xff]
    %v83 = vld [vmem:[%s3 + $0x70] sm:$0xff]
    %v84 = vld [vmem:[%s3 + $0x78] sm:$0xff]
    %v85 = vld [vmem:[%s3 + $0x80] sm:$0xff]
    %v86 = vld [vmem:[%s3 + $0x88] sm:$0xff]
    %v87 = vld [vmem:[%s3 + $0x90] sm:$0xff]
    %v88 = vld [vmem:[%s3 + $0x98] sm:$0xff]
    %v89 = vld [vmem:[%s3 + $0xa0] sm:$0xff]
    %v90 = vld [vmem:[%s3 + $0xa8] sm:$0xff]
    %v91 = vld [vmem:[%s3 + $0xb0] sm:$0xff]
    %v92 = vld [vmem:[%s3 + $0xb8] sm:$0xff]
    %v93 = vld [vmem:[%s3 + $0xc0] sm:$0xff]
    %v94 = vld [vmem:[%s3 + $0xc8] sm:$0xff]
    %v95 = vld [vmem:[%s3 + $0xd0] sm:$0xff]
    %v96 = vld [vmem:[%s3 + $0xd8] sm:$0xff]
    %v97 = vld [vmem:[%s3 + $0xe0] sm:$0xff]
    %v98 = vld [vmem:[%s3 + $0xe8] sm:$0xff]
    %v99 = vld [vmem:[%s3 + $0xf0] sm:$0xff]
    %v100 = vld [vmem:[%s3 + $0xf8] sm:$0xff]
    %v101 = vld [vmem:[%s3 + $0x100] sm:$0xff]
    %v102 = vld [vmem:[%s3 + $0x108] sm:$0xff]
    %v103 = vld [vmem:[%s3 + $0x110] sm:$0xff]
    %v104 = vld [vmem:[%s3 + $0x118] sm:$0xff]
    %v105 = vld [vmem:[%s3 + $0x120] sm:$0xff]
    %v106 = vld [vmem:[%s3 + $0x128] sm:$0xff]
    %v107 = vld [vmem:[%s3 + $0x130] sm:$0xff]
    %v108 = vld [vmem:[%s3 + $0x138] sm:$0xff]
    %v109 = vld [vmem:[%s3 + $0x140] sm:$0xf]
    %v110 = vld [vmem:[%s4] sm:$0x1]
    %v112 = vlaneseq
    %v113 = vshrl.u32 %v112, 7
    %v114 = vsub.s32 0, %v113
    %v115 = vrot.slane %v110, %v114
    %vm117 = vcmask 556032
    %v119 = vsel %vm117, %v23, 0
    %v122 = vsel %vm117, %v26, 0
    %v125 = vsel %vm117, %v29, 0
    %v128 = vsel %vm117, %v32, 0
    %v131 = vsel %vm117, %v35, 0
    %v134 = vsel %vm117, %v38, 0
    %v137 = vsel %vm117, %v41, 0
    %v140 = vsel %vm117, %v44, 0
    %v143 = vsel %vm117, %v47, 0
    %v146 = vsel %vm117, %v50, 0
    %v149 = vsel %vm117, %v53, 0
    %v152 = vsel %vm117, %v56, 0
    %v155 = vsel %vm117, %v59, 0
    %v158 = vsel %vm117, %v62, 0
    %v161 = vsel %vm117, %v65, 0
    %v164 = vsel %vm117, %v68, 0
    %vm166 = vcmask 1043456
    %v168 = vsel %vm166, %v109, 0
    %170 = vmatprep.subr.mxu0 0.0
    %171 = vmatpush1.msra.mxu0 %v69
    %172 = vmatprep.subr.mxu0 0.0
    %173 = vmatpush1.msra.mxu0 %v70
    %174 = vmatprep.subr.mxu0 0.0
    %175 = vmatpush1.msra.mxu0 %v71
    %176 = vmatprep.subr.mxu0 0.0
    %177 = vmatpush1.msra.mxu0 %v72
    %178 = vmatprep.subr.mxu0 0.0
    %179 = vmatpush1.msra.mxu0 %v73
    %180 = vmatprep.subr.mxu0 0.0
    %181 = vmatpush1.msra.mxu0 %v74
    %182 = vmatprep.subr.mxu0 0.0
    %183 = vmatpush1.msra.mxu0 %v75
    %184 = vmatprep.subr.mxu0 0.0
    %185 = vmatpush1.msra.mxu0 %v76
    %186 = vmatprep.subr.mxu0 0.0
    %187 = vmatpush1.msra.mxu0 %v77
    %188 = vmatprep.subr.mxu0 0.0
    %189 = vmatpush1.msra.mxu0 %v78
    %190 = vmatprep.subr.mxu0 0.0
    %191 = vmatpush1.msra.mxu0 %v79
    %192 = vmatprep.subr.mxu0 0.0
    %193 = vmatpush1.msra.mxu0 %v80
    %194 = vmatprep.subr.mxu0 0.0
    %195 = vmatpush1.msra.mxu0 %v81
    %196 = vmatprep.subr.mxu0 0.0
    %197 = vmatpush1.msra.mxu0 %v82
    %198 = vmatprep.subr.mxu0 0.0
    %199 = vmatpush1.msra.mxu0 %v83
    %200 = vmatprep.subr.mxu0 0.0
    %201 = vmatpush1.msra.mxu0 %v84
    %202 = vmatprep.subr.mxu0 0.0
    %203 = vmatpush1.msra.mxu0 %v85
    %204 = vmatprep.subr.mxu0 0.0
    %205 = vmatpush1.msra.mxu0 %v86
    %206 = vmatprep.subr.mxu0 0.0
    %207 = vmatpush1.msra.mxu0 %v87
    %208 = vmatprep.subr.mxu0 0.0
    %209 = vmatpush1.msra.mxu0 %v88
    %210 = vmatprep.subr.mxu0 0.0
    %211 = vmatpush1.msra.mxu0 %v89
    %212 = vmatprep.subr.mxu0 0.0
    %213 = vmatpush1.msra.mxu0 %v90
    %214 = vmatprep.subr.mxu0 0.0
    %215 = vmatpush1.msra.mxu0 %v91
    %216 = vmatprep.subr.mxu0 0.0
    %217 = vmatpush1.msra.mxu0 %v92
    %218 = vmatprep.subr.mxu0 0.0
    %219 = vmatpush1.msra.mxu0 %v93
    %220 = vmatprep.subr.mxu0 0.0
    %221 = vmatpush1.msra.mxu0 %v94
    %222 = vmatprep.subr.mxu0 0.0
    %223 = vmatpush1.msra.mxu0 %v95
    %224 = vmatprep.subr.mxu0 0.0
    %225 = vmatpush1.msra.mxu0 %v96
    %226 = vmatprep.subr.mxu0 0.0
    %227 = vmatpush1.msra.mxu0 %v97
    %228 = vmatprep.subr.mxu0 0.0
    %229 = vmatpush1.msra.mxu0 %v98
    %230 = vmatprep.subr.mxu0 0.0
    %231 = vmatpush1.msra.mxu0 %v99
    %232 = vmatprep.subr.mxu0 0.0
    %233 = vmatpush1.msra.mxu0 %v100
    %234 = vmatprep.mubr.f32.mxu0 %v22
    %235 = vmatmul.mubr.f32.gmra.mrb[0].mxu0 %v21
    %v236 = vpop.f32.mrb[0].mxu0
    %v237 = vadd.f32 %v115, %v236
    %v238 = vpop.f32.mrb[0].mxu0
    %239 = vmatprep.mubr.f32.mxu0 %v25
    %240 = vmatmul.mubr.f32.gmra.mrb[0].mxu0 %v24
    %v241 = vpop.f32.mrb[0].mxu0
    %v242 = vadd.f32 %v115, %v241
    %v243 = vpop.f32.mrb[0].mxu0
    %244 = vmatprep.mubr.f32.mxu0 %v28
    %245 = vmatmul.mubr.f32.gmra.mrb[0].mxu0 %v27
    %v246 = vpop.f32.mrb[0].mxu0
    %v247 = vadd.f32 %v115, %v246
    %v248 = vpop.f32.mrb[0].mxu0
    %249 = vmatprep.mubr.f32.mxu0 %v31
    %250 = vmatmul.mubr.f32.gmra.mrb[0].mxu0 %v30
    %v251 = vpop.f32.mrb[0].mxu0
    %v252 = vadd.f32 %v115, %v251
    %v253 = vpop.f32.mrb[0].mxu0
    %254 = vmatprep.mubr.f32.mxu0 %v34
    %255 = vmatmul.mubr.f32.gmra.mrb[0].mxu0 %v33
    %v256 = vpop.f32.mrb[0].mxu0
    %v257 = vadd.f32 %v115, %v256
    %v258 = vpop.f32.mrb[0].mxu0
    %259 = vmatprep.mubr.f32.mxu0 %v37
    %260 = vmatmul.mubr.f32.gmra.mrb[0].mxu0 %v36
    %v261 = vpop.f32.mrb[0].mxu0
    %v262 = vadd.f32 %v115, %v261
    %v263 = vpop.f32.mrb[0].mxu0
    %264 = vmatprep.mubr.f32.mxu0 %v40
    %265 = vmatmul.mubr.f32.gmra.mrb[0].mxu0 %v39
    %v266 = vpop.f32.mrb[0].mxu0
    %v267 = vadd.f32 %v115, %v266
    %v268 = vpop.f32.mrb[0].mxu0
    %269 = vmatprep.mubr.f32.mxu0 %v43
    %270 = vmatmul.mubr.f32.gmra.mrb[0].mxu0 %v42
    %v271 = vpop.f32.mrb[0].mxu0
    %v272 = vadd.f32 %v115, %v271
    %v273 = vpop.f32.mrb[0].mxu0
    %274 = vmatprep.mubr.f32.mxu0 %v46
    %275 = vmatmul.mubr.f32.gmra.mrb[0].mxu0 %v45
    %v276 = vpop.f32.mrb[0].mxu0
    %v277 = vadd.f32 %v115, %v276
    %v278 = vpop.f32.mrb[0].mxu0
    %279 = vmatprep.mubr.f32.mxu0 %v49
    %280 = vmatmul.mubr.f32.gmra.mrb[0].mxu0 %v48
    %v281 = vpop.f32.mrb[0].mxu0
    %v282 = vadd.f32 %v115, %v281
    %v283 = vpop.f32.mrb[0].mxu0
    %284 = vmatprep.mubr.f32.mxu0 %v52
    %285 = vmatmul.mubr.f32.gmra.mrb[0].mxu0 %v51
    %v286 = vpop.f32.mrb[0].mxu0
    %v287 = vadd.f32 %v115, %v286
    %v288 = vpop.f32.mrb[0].mxu0
    %289 = vmatprep.mubr.f32.mxu0 %v55
    %290 = vmatmul.mubr.f32.gmra.mrb[0].mxu0 %v54
    %v291 = vpop.f32.mrb[0].mxu0
    %v292 = vadd.f32 %v115, %v291
    %v293 = vpop.f32.mrb[0].mxu0
    %294 = vmatprep.mubr.f32.mxu0 %v58
    %295 = vmatmul.mubr.f32.gmra.mrb[0].mxu0 %v57
    %v296 = vpop.f32.mrb[0].mxu0
    %v297 = vadd.f32 %v115, %v296
    %v298 = vpop.f32.mrb[0].mxu0
    %299 = vmatprep.mubr.f32.mxu0 %v61
    %300 = vmatmul.mubr.f32.gmra.mrb[0].mxu0 %v60
    %v301 = vpop.f32.mrb[0].mxu0
    %v302 = vadd.f32 %v115, %v301
    %v303 = vpop.f32.mrb[0].mxu0
    %304 = vmatprep.mubr.f32.mxu0 %v64
    %305 = vmatmul.mubr.f32.gmra.mrb[0].mxu0 %v63
    %v306 = vpop.f32.mrb[0].mxu0
    %v307 = vadd.f32 %v115, %v306
    %v308 = vpop.f32.mrb[0].mxu0
    %309 = vmatprep.mubr.f32.mxu0 %v67
    %310 = vmatmul.mubr.f32.gmra.mrb[0].mxu0 %v66
    %v311 = vpop.f32.mrb[0].mxu0
    %v312 = vadd.f32 %v115, %v311
    %v313 = vpop.f32.mrb[0].mxu0
    %314 = vdwg.mxu0
    %315 = vmatprep.subr.mxu0 0.0
    %316 = vmatpush1.msra.mxu0 %v101
    %317 = vmatprep.subr.mxu0 0.0
    %318 = vmatpush1.msra.mxu0 %v102
    %319 = vmatprep.subr.mxu0 0.0
    %320 = vmatpush1.msra.mxu0 %v103
    %321 = vmatprep.subr.mxu0 0.0
    %322 = vmatpush1.msra.mxu0 %v104
    %323 = vmatprep.subr.mxu0 0.0
    %324 = vmatpush1.msra.mxu0 %v105
    %325 = vmatprep.subr.mxu0 0.0
    %326 = vmatpush1.msra.mxu0 %v106
    %327 = vmatprep.subr.mxu0 0.0
    %328 = vmatpush1.msra.mxu0 %v107
    %329 = vmatprep.subr.mxu0 0.0
    %330 = vmatpush1.msra.mxu0 %v108
    %331 = vmatprep.subr.mxu0 0.0
    %332 = vmatpush1.msra.mxu0 %v168
    %333 = vmatprep.subr.mxu0 0.0
    %334 = vmatpush1.msra.mxu0 0.0
    %335 = vmatprep.subr.mxu0 0.0
    %336 = vmatpush1.msra.mxu0 0.0
    %337 = vmatprep.subr.mxu0 0.0
    %338 = vmatpush1.msra.mxu0 0.0
    %339 = vmatprep.subr.mxu0 0.0
    %340 = vmatpush1.msra.mxu0 0.0
    %341 = vmatprep.subr.mxu0 0.0
    %342 = vmatpush1.msra.mxu0 0.0
    %343 = vmatprep.subr.mxu0 0.0
    %344 = vmatpush1.msra.mxu0 0.0
    %345 = vmatprep.subr.mxu0 0.0
    %346 = vmatpush1.msra.mxu0 0.0
    %347 = vmatprep.subr.mxu0 0.0
    %348 = vmatpush1.msra.mxu0 0.0
    %349 = vmatprep.subr.mxu0 0.0
    %350 = vmatpush1.msra.mxu0 0.0
    %351 = vmatprep.subr.mxu0 0.0
    %352 = vmatpush1.msra.mxu0 0.0
    %353 = vmatprep.subr.mxu0 0.0
    %354 = vmatpush1.msra.mxu0 0.0
    %355 = vmatprep.subr.mxu0 0.0
    %356 = vmatpush1.msra.mxu0 0.0
    %357 = vmatprep.subr.mxu0 0.0
    %358 = vmatpush1.msra.mxu0 0.0
    %359 = vmatprep.subr.mxu0 0.0
    %360 = vmatpush1.msra.mxu0 0.0
    %361 = vmatprep.subr.mxu0 0.0
    %362 = vmatpush1.msra.mxu0 0.0
    %363 = vmatprep.subr.mxu0 0.0
    %364 = vmatpush1.msra.mxu0 0.0
    %365 = vmatprep.subr.mxu0 0.0
    %366 = vmatpush1.msra.mxu0 0.0
    %367 = vmatprep.subr.mxu0 0.0
    %368 = vmatpush1.msra.mxu0 0.0
    %369 = vmatprep.subr.mxu0 0.0
    %370 = vmatpush1.msra.mxu0 0.0
    %371 = vmatprep.subr.mxu0 0.0
    %372 = vmatpush1.msra.mxu0 0.0
    %373 = vmatprep.subr.mxu0 0.0
    %374 = vmatpush1.msra.mxu0 0.0
    %375 = vmatprep.subr.mxu0 0.0
    %376 = vmatpush1.msra.mxu0 0.0
    %377 = vmatprep.subr.mxu0 0.0
    %378 = vmatpush1.msra.mxu0 0.0
    %379 = vmatprep.mubr.f32.mxu0 0.0
    %380 = vmatmul.mubr.f32.gmra.mrb[0].mxu0 %v119
    %v381 = vpop.f32.mrb[0].mxu0
    %v382 = vadd.f32 %v237, %v381
    %v383 = vpop.f32.mrb[0].mxu0
    %384 = vmatprep.mubr.f32.mxu0 0.0
    %385 = vmatmul.mubr.f32.gmra.mrb[0].mxu0 %v122
    %v386 = vpop.f32.mrb[0].mxu0
    %v387 = vadd.f32 %v242, %v386
    %v388 = vpop.f32.mrb[0].mxu0
    %389 = vmatprep.mubr.f32.mxu0 0.0
    %390 = vmatmul.mubr.f32.gmra.mrb[0].mxu0 %v125
    %v391 = vpop.f32.mrb[0].mxu0
    %v392 = vadd.f32 %v247, %v391
    %v393 = vpop.f32.mrb[0].mxu0
    %394 = vmatprep.mubr.f32.mxu0 0.0
    %395 = vmatmul.mubr.f32.gmra.mrb[0].mxu0 %v128
    %v396 = vpop.f32.mrb[0].mxu0
    %v397 = vadd.f32 %v252, %v396
    %v398 = vpop.f32.mrb[0].mxu0
    %399 = vmatprep.mubr.f32.mxu0 0.0
    %400 = vmatmul.mubr.f32.gmra.mrb[0].mxu0 %v131
    %v401 = vpop.f32.mrb[0].mxu0
    %v402 = vadd.f32 %v257, %v401
    %v403 = vpop.f32.mrb[0].mxu0
    %404 = vmatprep.mubr.f32.mxu0 0.0
    %405 = vmatmul.mubr.f32.gmra.mrb[0].mxu0 %v134
    %v406 = vpop.f32.mrb[0].mxu0
    %v407 = vadd.f32 %v262, %v406
    %v408 = vpop.f32.mrb[0].mxu0
    %409 = vmatprep.mubr.f32.mxu0 0.0
    %410 = vmatmul.mubr.f32.gmra.mrb[0].mxu0 %v137
    %v411 = vpop.f32.mrb[0].mxu0
    %v412 = vadd.f32 %v267, %v411
    %v413 = vpop.f32.mrb[0].mxu0
    %414 = vmatprep.mubr.f32.mxu0 0.0
    %415 = vmatmul.mubr.f32.gmra.mrb[0].mxu0 %v140
    %v416 = vpop.f32.mrb[0].mxu0
    %v417 = vadd.f32 %v272, %v416
    %v418 = vpop.f32.mrb[0].mxu0
    %419 = vmatprep.mubr.f32.mxu0 0.0
    %420 = vmatmul.mubr.f32.gmra.mrb[0].mxu0 %v143
    %v421 = vpop.f32.mrb[0].mxu0
    %v422 = vadd.f32 %v277, %v421
    %v423 = vpop.f32.mrb[0].mxu0
    %424 = vmatprep.mubr.f32.mxu0 0.0
    %425 = vmatmul.mubr.f32.gmra.mrb[0].mxu0 %v146
    %v426 = vpop.f32.mrb[0].mxu0
    %v427 = vadd.f32 %v282, %v426
    %v428 = vpop.f32.mrb[0].mxu0
    %429 = vmatprep.mubr.f32.mxu0 0.0
    %430 = vmatmul.mubr.f32.gmra.mrb[0].mxu0 %v149
    %v431 = vpop.f32.mrb[0].mxu0
    %v432 = vadd.f32 %v287, %v431
    %v433 = vpop.f32.mrb[0].mxu0
    %434 = vmatprep.mubr.f32.mxu0 0.0
    %435 = vmatmul.mubr.f32.gmra.mrb[0].mxu0 %v152
    %v436 = vpop.f32.mrb[0].mxu0
    %v437 = vadd.f32 %v292, %v436
    %v438 = vpop.f32.mrb[0].mxu0
    %439 = vmatprep.mubr.f32.mxu0 0.0
    %440 = vmatmul.mubr.f32.gmra.mrb[0].mxu0 %v155
    %v441 = vpop.f32.mrb[0].mxu0
    %v442 = vadd.f32 %v297, %v441
    %v443 = vpop.f32.mrb[0].mxu0
    %444 = vmatprep.mubr.f32.mxu0 0.0
    %445 = vmatmul.mubr.f32.gmra.mrb[0].mxu0 %v158
    %v446 = vpop.f32.mrb[0].mxu0
    %v447 = vadd.f32 %v302, %v446
    %v448 = vpop.f32.mrb[0].mxu0
    %449 = vmatprep.mubr.f32.mxu0 0.0
    %450 = vmatmul.mubr.f32.gmra.mrb[0].mxu0 %v161
    %v451 = vpop.f32.mrb[0].mxu0
    %v452 = vadd.f32 %v307, %v451
    %v453 = vpop.f32.mrb[0].mxu0
    %454 = vmatprep.mubr.f32.mxu0 0.0
    %455 = vmatmul.mubr.f32.gmra.mrb[0].mxu0 %v164
    %v456 = vpop.f32.mrb[0].mxu0
    %v457 = vadd.f32 %v312, %v456
    %v458 = vpop.f32.mrb[0].mxu0
    %459 = vdwg.mxu0
    %v460 = vld [vmem:[%s1] sm:$0xff]
    %v461 = vld [vmem:[%s1 + $0x8] sm:$0xff]
    %v462 = vld [vmem:[%s1 + $0x10] sm:$0xff]
    %v463 = vld [vmem:[%s1 + $0x18] sm:$0xff]
    %v464 = vld [vmem:[%s1 + $0x20] sm:$0xff]
    %v465 = vld [vmem:[%s1 + $0x28] sm:$0xff]
    %v466 = vld [vmem:[%s1 + $0x30] sm:$0xff]
    %v467 = vld [vmem:[%s1 + $0x38] sm:$0xff]
    %v468 = vld [vmem:[%s1 + $0x40] sm:$0xff]
    %v469 = vld [vmem:[%s1 + $0x48] sm:$0xff]
    %v470 = vld [vmem:[%s1 + $0x50] sm:$0xff]
    %v471 = vld [vmem:[%s1 + $0x58] sm:$0xff]
    %v472 = vld [vmem:[%s1 + $0x60] sm:$0xff]
    %v473 = vld [vmem:[%s1 + $0x68] sm:$0xff]
    %v474 = vld [vmem:[%s1 + $0x70] sm:$0xff]
    %v475 = vld [vmem:[%s1 + $0x78] sm:$0xff]
    %v476 = vld [vmem:[%s2] sm:$0xff]
    %v477 = vld [vmem:[%s2 + $0x8] sm:$0xff]
    %v478 = vld [vmem:[%s2 + $0x10] sm:$0xff]
    %v479 = vld [vmem:[%s2 + $0x18] sm:$0xff]
    %v480 = vld [vmem:[%s2 + $0x20] sm:$0xff]
    %v481 = vld [vmem:[%s2 + $0x28] sm:$0xff]
    %v482 = vld [vmem:[%s2 + $0x30] sm:$0xff]
    %v483 = vld [vmem:[%s2 + $0x38] sm:$0xff]
    %v484 = vld [vmem:[%s2 + $0x40] sm:$0xff]
    %v485 = vld [vmem:[%s2 + $0x48] sm:$0xff]
    %v486 = vld [vmem:[%s2 + $0x50] sm:$0xff]
    %v487 = vld [vmem:[%s2 + $0x58] sm:$0xff]
    %v488 = vld [vmem:[%s2 + $0x60] sm:$0xff]
    %v489 = vld [vmem:[%s2 + $0x68] sm:$0xff]
    %v490 = vld [vmem:[%s2 + $0x70] sm:$0xff]
    %v491 = vld [vmem:[%s2 + $0x78] sm:$0xff]
    %v492 = vmul.f32 %v460, %v476
    %v493 = vmul.f32 %v461, %v477
    %v494 = vmul.f32 %v462, %v478
    %v495 = vmul.f32 %v463, %v479
    %v496 = vmul.f32 %v464, %v480
    %v497 = vmul.f32 %v465, %v481
    %v498 = vmul.f32 %v466, %v482
    %v499 = vmul.f32 %v467, %v483
    %v500 = vmul.f32 %v468, %v484
    %v501 = vmul.f32 %v469, %v485
    %v502 = vmul.f32 %v470, %v486
    %v503 = vmul.f32 %v471, %v487
    %v504 = vmul.f32 %v472, %v488
    %v505 = vmul.f32 %v473, %v489
    %v506 = vmul.f32 %v474, %v490
    %v507 = vmul.f32 %v475, %v491
    %v508 = vadd.f32 %v382, %v492
    %v509 = vadd.f32 %v387, %v493
    %v510 = vadd.f32 %v392, %v494
    %v511 = vadd.f32 %v397, %v495
    %v512 = vadd.f32 %v402, %v496
    %v513 = vadd.f32 %v407, %v497
    %v514 = vadd.f32 %v412, %v498
    %v515 = vadd.f32 %v417, %v499
    %v516 = vadd.f32 %v422, %v500
    %v517 = vadd.f32 %v427, %v501
    %v518 = vadd.f32 %v432, %v502
    %v519 = vadd.f32 %v437, %v503
    %v520 = vadd.f32 %v442, %v504
    %v521 = vadd.f32 %v447, %v505
    %v522 = vadd.f32 %v452, %v506
    %v523 = vadd.f32 %v457, %v507
    %v524 = vsub.f32 0.0, %v508
    %v525 = vsub.f32 0.0, %v509
    %v526 = vsub.f32 0.0, %v510
    %v527 = vsub.f32 0.0, %v511
    %v528 = vsub.f32 0.0, %v512
    %v529 = vsub.f32 0.0, %v513
    %v530 = vsub.f32 0.0, %v514
    %v531 = vsub.f32 0.0, %v515
    %v532 = vsub.f32 0.0, %v516
    %v533 = vsub.f32 0.0, %v517
    %v534 = vsub.f32 0.0, %v518
    %v535 = vsub.f32 0.0, %v519
    %v536 = vsub.f32 0.0, %v520
    %v537 = vsub.f32 0.0, %v521
    %v538 = vsub.f32 0.0, %v522
    %v539 = vsub.f32 0.0, %v523
    %v540 = vmul.f32 %v524, 1.442695
    %v541 = vpow.pop %v540
    %v542 = vmul.f32 %v525, 1.442695
    %v543 = vpow.pop %v542
    %v544 = vmul.f32 %v526, 1.442695
    %v545 = vpow.pop %v544
    %v546 = vmul.f32 %v527, 1.442695
    %v547 = vpow.pop %v546
    %v548 = vmul.f32 %v528, 1.442695
    %v549 = vpow.pop %v548
    %v550 = vmul.f32 %v529, 1.442695
    %v551 = vpow.pop %v550
    %v552 = vmul.f32 %v530, 1.442695
    %v553 = vpow.pop %v552
    %v554 = vmul.f32 %v531, 1.442695
    %v555 = vpow.pop %v554
    %v556 = vmul.f32 %v532, 1.442695
    %v557 = vpow.pop %v556
    %v558 = vmul.f32 %v533, 1.442695
    %v559 = vpow.pop %v558
    %v560 = vmul.f32 %v534, 1.442695
    %v561 = vpow.pop %v560
    %v562 = vmul.f32 %v535, 1.442695
    %v563 = vpow.pop %v562
    %v564 = vmul.f32 %v536, 1.442695
    %v565 = vpow.pop %v564
    %v566 = vmul.f32 %v537, 1.442695
    %v567 = vpow.pop %v566
    %v568 = vmul.f32 %v538, 1.442695
    %v569 = vpow.pop %v568
    %v570 = vmul.f32 %v539, 1.442695
    %v571 = vpow.pop %v570
    %v572 = vadd.f32 %v541, 1.0
    %v573 = vadd.f32 %v543, 1.0
    %v574 = vadd.f32 %v545, 1.0
    %v575 = vadd.f32 %v547, 1.0
    %v576 = vadd.f32 %v549, 1.0
    %v577 = vadd.f32 %v551, 1.0
    %v578 = vadd.f32 %v553, 1.0
    %v579 = vadd.f32 %v555, 1.0
    %v580 = vadd.f32 %v557, 1.0
    %v581 = vadd.f32 %v559, 1.0
    %v582 = vadd.f32 %v561, 1.0
    %v583 = vadd.f32 %v563, 1.0
    %v584 = vadd.f32 %v565, 1.0
    %v585 = vadd.f32 %v567, 1.0
    %v586 = vadd.f32 %v569, 1.0
    %v587 = vadd.f32 %v571, 1.0
    %v588 = vrcp.pop %v572
    %v589 = vrcp.pop %v573
    %v590 = vrcp.pop %v574
    %v591 = vrcp.pop %v575
    %v592 = vrcp.pop %v576
    %v593 = vrcp.pop %v577
    %v594 = vrcp.pop %v578
    %v595 = vrcp.pop %v579
    %v596 = vrcp.pop %v580
    %v597 = vrcp.pop %v581
    %v598 = vrcp.pop %v582
    %v599 = vrcp.pop %v583
    %v600 = vrcp.pop %v584
    %v601 = vrcp.pop %v585
    %v602 = vrcp.pop %v586
    %v603 = vrcp.pop %v587
    %620 = vrot.lane.b32.xlu0 %v476, 96
    %v621 = vpop.permute.xlu0 %620
    %622 = vrot.lane.b32.xlu0 %v477, 96
    %v623 = vpop.permute.xlu0 %622
    %624 = vrot.lane.b32.xlu0 %v478, 96
    %v625 = vpop.permute.xlu0 %624
    %626 = vrot.lane.b32.xlu0 %v479, 96
    %v627 = vpop.permute.xlu0 %626
    %628 = vrot.lane.b32.xlu0 %v480, 96
    %v629 = vpop.permute.xlu0 %628
    %630 = vrot.lane.b32.xlu0 %v481, 96
    %v631 = vpop.permute.xlu0 %630
    %632 = vrot.lane.b32.xlu0 %v482, 96
    %v633 = vpop.permute.xlu0 %632
    %634 = vrot.lane.b32.xlu0 %v483, 96
    %v635 = vpop.permute.xlu0 %634
    %636 = vrot.lane.b32.xlu0 %v484, 96
    %v637 = vpop.permute.xlu0 %636
    %638 = vrot.lane.b32.xlu0 %v485, 96
    %v639 = vpop.permute.xlu0 %638
    %640 = vrot.lane.b32.xlu0 %v486, 96
    %v641 = vpop.permute.xlu0 %640
    %642 = vrot.lane.b32.xlu0 %v487, 96
    %v643 = vpop.permute.xlu0 %642
    %644 = vrot.lane.b32.xlu0 %v488, 96
    %v645 = vpop.permute.xlu0 %644
    %646 = vrot.lane.b32.xlu0 %v489, 96
    %v647 = vpop.permute.xlu0 %646
    %648 = vrot.lane.b32.xlu0 %v490, 96
    %v649 = vpop.permute.xlu0 %648
    %650 = vrot.lane.b32.xlu0 %v491, 96
    %v651 = vpop.permute.xlu0 %650
    %v668 = vmul.f32 %v460, %v621
    %v669 = vmul.f32 %v461, %v623
    %v670 = vmul.f32 %v462, %v625
    %v671 = vmul.f32 %v463, %v627
    %v672 = vmul.f32 %v464, %v629
    %v673 = vmul.f32 %v465, %v631
    %v674 = vmul.f32 %v466, %v633
    %v675 = vmul.f32 %v467, %v635
    %v676 = vmul.f32 %v468, %v637
    %v677 = vmul.f32 %v469, %v639
    %v678 = vmul.f32 %v470, %v641
    %v679 = vmul.f32 %v471, %v643
    %v680 = vmul.f32 %v472, %v645
    %v681 = vmul.f32 %v473, %v647
    %v682 = vmul.f32 %v474, %v649
    %v683 = vmul.f32 %v475, %v651
    %700 = vrot.lane.b32.xlu0 %v668, 32
    %v701 = vpop.permute.xlu0 %700
    %702 = vrot.lane.b32.xlu0 %v669, 32
    %v703 = vpop.permute.xlu0 %702
    %704 = vrot.lane.b32.xlu0 %v670, 32
    %v705 = vpop.permute.xlu0 %704
    %706 = vrot.lane.b32.xlu0 %v671, 32
    %v707 = vpop.permute.xlu0 %706
    %708 = vrot.lane.b32.xlu0 %v672, 32
    %v709 = vpop.permute.xlu0 %708
    %710 = vrot.lane.b32.xlu0 %v673, 32
    %v711 = vpop.permute.xlu0 %710
    %712 = vrot.lane.b32.xlu0 %v674, 32
    %v713 = vpop.permute.xlu0 %712
    %714 = vrot.lane.b32.xlu0 %v675, 32
    %v715 = vpop.permute.xlu0 %714
    %716 = vrot.lane.b32.xlu0 %v676, 32
    %v717 = vpop.permute.xlu0 %716
    %718 = vrot.lane.b32.xlu0 %v677, 32
    %v719 = vpop.permute.xlu0 %718
    %720 = vrot.lane.b32.xlu0 %v678, 32
    %v721 = vpop.permute.xlu0 %720
    %722 = vrot.lane.b32.xlu0 %v679, 32
    %v723 = vpop.permute.xlu0 %722
    %724 = vrot.lane.b32.xlu0 %v680, 32
    %v725 = vpop.permute.xlu0 %724
    %726 = vrot.lane.b32.xlu0 %v681, 32
    %v727 = vpop.permute.xlu0 %726
    %728 = vrot.lane.b32.xlu0 %v682, 32
    %v729 = vpop.permute.xlu0 %728
    %730 = vrot.lane.b32.xlu0 %v683, 32
    %v731 = vpop.permute.xlu0 %730
    %v748 = vadd.f32 %v382, %v701
    %v749 = vadd.f32 %v387, %v703
    %v750 = vadd.f32 %v392, %v705
    %v751 = vadd.f32 %v397, %v707
    %v752 = vadd.f32 %v402, %v709
    %v753 = vadd.f32 %v407, %v711
    %v754 = vadd.f32 %v412, %v713
    %v755 = vadd.f32 %v417, %v715
    %v756 = vadd.f32 %v422, %v717
    %v757 = vadd.f32 %v427, %v719
    %v758 = vadd.f32 %v432, %v721
    %v759 = vadd.f32 %v437, %v723
    %v760 = vadd.f32 %v442, %v725
    %v761 = vadd.f32 %v447, %v727
    %v762 = vadd.f32 %v452, %v729
    %v763 = vadd.f32 %v457, %v731
    %v764 = vsub.f32 0.0, %v748
    %v765 = vsub.f32 0.0, %v749
    %v766 = vsub.f32 0.0, %v750
    %v767 = vsub.f32 0.0, %v751
    %v768 = vsub.f32 0.0, %v752
    %v769 = vsub.f32 0.0, %v753
    %v770 = vsub.f32 0.0, %v754
    %v771 = vsub.f32 0.0, %v755
    %v772 = vsub.f32 0.0, %v756
    %v773 = vsub.f32 0.0, %v757
    %v774 = vsub.f32 0.0, %v758
    %v775 = vsub.f32 0.0, %v759
    %v776 = vsub.f32 0.0, %v760
    %v777 = vsub.f32 0.0, %v761
    %v778 = vsub.f32 0.0, %v762
    %v779 = vsub.f32 0.0, %v763
    %v780 = vmul.f32 %v764, 1.442695
    %v781 = vpow.pop %v780
    %v782 = vmul.f32 %v765, 1.442695
    %v783 = vpow.pop %v782
    %v784 = vmul.f32 %v766, 1.442695
    %v785 = vpow.pop %v784
    %v786 = vmul.f32 %v767, 1.442695
    %v787 = vpow.pop %v786
    %v788 = vmul.f32 %v768, 1.442695
    %v789 = vpow.pop %v788
    %v790 = vmul.f32 %v769, 1.442695
    %v791 = vpow.pop %v790
    %v792 = vmul.f32 %v770, 1.442695
    %v793 = vpow.pop %v792
    %v794 = vmul.f32 %v771, 1.442695
    %v795 = vpow.pop %v794
    %v796 = vmul.f32 %v772, 1.442695
    %v797 = vpow.pop %v796
    %v798 = vmul.f32 %v773, 1.442695
    %v799 = vpow.pop %v798
    %v800 = vmul.f32 %v774, 1.442695
    %v801 = vpow.pop %v800
    %v802 = vmul.f32 %v775, 1.442695
    %v803 = vpow.pop %v802
    %v804 = vmul.f32 %v776, 1.442695
    %v805 = vpow.pop %v804
    %v806 = vmul.f32 %v777, 1.442695
    %v807 = vpow.pop %v806
    %v808 = vmul.f32 %v778, 1.442695
    %v809 = vpow.pop %v808
    %v810 = vmul.f32 %v779, 1.442695
    %v811 = vpow.pop %v810
    %v812 = vadd.f32 %v781, 1.0
    %v813 = vadd.f32 %v783, 1.0
    %v814 = vadd.f32 %v785, 1.0
    %v815 = vadd.f32 %v787, 1.0
    %v816 = vadd.f32 %v789, 1.0
    %v817 = vadd.f32 %v791, 1.0
    %v818 = vadd.f32 %v793, 1.0
    %v819 = vadd.f32 %v795, 1.0
    %v820 = vadd.f32 %v797, 1.0
    %v821 = vadd.f32 %v799, 1.0
    %v822 = vadd.f32 %v801, 1.0
    %v823 = vadd.f32 %v803, 1.0
    %v824 = vadd.f32 %v805, 1.0
    %v825 = vadd.f32 %v807, 1.0
    %v826 = vadd.f32 %v809, 1.0
    %v827 = vadd.f32 %v811, 1.0
    %v828 = vrcp.pop %v812
    %v829 = vrcp.pop %v813
    %v830 = vrcp.pop %v814
    %v831 = vrcp.pop %v815
    %v832 = vrcp.pop %v816
    %v833 = vrcp.pop %v817
    %v834 = vrcp.pop %v818
    %v835 = vrcp.pop %v819
    %v836 = vrcp.pop %v820
    %v837 = vrcp.pop %v821
    %v838 = vrcp.pop %v822
    %v839 = vrcp.pop %v823
    %v840 = vrcp.pop %v824
    %v841 = vrcp.pop %v825
    %v842 = vrcp.pop %v826
    %v843 = vrcp.pop %v827
    %v844 = vtanh.pop %v382
    %v845 = vtanh.pop %v387
    %v846 = vtanh.pop %v392
    %v847 = vtanh.pop %v397
    %v848 = vtanh.pop %v402
    %v849 = vtanh.pop %v407
    %v850 = vtanh.pop %v412
    %v851 = vtanh.pop %v417
    %v852 = vtanh.pop %v422
    %v853 = vtanh.pop %v427
    %v854 = vtanh.pop %v432
    %v855 = vtanh.pop %v437
    %v856 = vtanh.pop %v442
    %v857 = vtanh.pop %v447
    %v858 = vtanh.pop %v452
    %v859 = vtanh.pop %v457
    %876 = vrot.lane.b32.xlu0 %v460, 32
    %v877 = vpop.permute.xlu0 %876
    %878 = vrot.lane.b32.xlu0 %v461, 32
    %v879 = vpop.permute.xlu0 %878
    %880 = vrot.lane.b32.xlu0 %v462, 32
    %v881 = vpop.permute.xlu0 %880
    %882 = vrot.lane.b32.xlu0 %v463, 32
    %v883 = vpop.permute.xlu0 %882
    %884 = vrot.lane.b32.xlu0 %v464, 32
    %v885 = vpop.permute.xlu0 %884
    %886 = vrot.lane.b32.xlu0 %v465, 32
    %v887 = vpop.permute.xlu0 %886
    %888 = vrot.lane.b32.xlu0 %v466, 32
    %v889 = vpop.permute.xlu0 %888
    %890 = vrot.lane.b32.xlu0 %v467, 32
    %v891 = vpop.permute.xlu0 %890
    %892 = vrot.lane.b32.xlu0 %v468, 32
    %v893 = vpop.permute.xlu0 %892
    %894 = vrot.lane.b32.xlu0 %v469, 32
    %v895 = vpop.permute.xlu0 %894
    %896 = vrot.lane.b32.xlu0 %v470, 32
    %v897 = vpop.permute.xlu0 %896
    %898 = vrot.lane.b32.xlu0 %v471, 32
    %v899 = vpop.permute.xlu0 %898
    %900 = vrot.lane.b32.xlu0 %v472, 32
    %v901 = vpop.permute.xlu0 %900
    %902 = vrot.lane.b32.xlu0 %v473, 32
    %v903 = vpop.permute.xlu0 %902
    %904 = vrot.lane.b32.xlu0 %v474, 32
    %v905 = vpop.permute.xlu0 %904
    %906 = vrot.lane.b32.xlu0 %v475, 32
    %v907 = vpop.permute.xlu0 %906
    %v924 = vmul.f32 %v828, %v877
    %v925 = vmul.f32 %v829, %v879
    %v926 = vmul.f32 %v830, %v881
    %v927 = vmul.f32 %v831, %v883
    %v928 = vmul.f32 %v832, %v885
    %v929 = vmul.f32 %v833, %v887
    %v930 = vmul.f32 %v834, %v889
    %v931 = vmul.f32 %v835, %v891
    %v932 = vmul.f32 %v836, %v893
    %v933 = vmul.f32 %v837, %v895
    %v934 = vmul.f32 %v838, %v897
    %v935 = vmul.f32 %v839, %v899
    %v936 = vmul.f32 %v840, %v901
    %v937 = vmul.f32 %v841, %v903
    %v938 = vmul.f32 %v842, %v905
    %v939 = vmul.f32 %v843, %v907
    %956 = vrot.lane.b32.xlu0 %v924, 96
    %v957 = vpop.permute.xlu0 %956
    %958 = vrot.lane.b32.xlu0 %v925, 96
    %v959 = vpop.permute.xlu0 %958
    %960 = vrot.lane.b32.xlu0 %v926, 96
    %v961 = vpop.permute.xlu0 %960
    %962 = vrot.lane.b32.xlu0 %v927, 96
    %v963 = vpop.permute.xlu0 %962
    %964 = vrot.lane.b32.xlu0 %v928, 96
    %v965 = vpop.permute.xlu0 %964
    %966 = vrot.lane.b32.xlu0 %v929, 96
    %v967 = vpop.permute.xlu0 %966
    %968 = vrot.lane.b32.xlu0 %v930, 96
    %v969 = vpop.permute.xlu0 %968
    %970 = vrot.lane.b32.xlu0 %v931, 96
    %v971 = vpop.permute.xlu0 %970
    %972 = vrot.lane.b32.xlu0 %v932, 96
    %v973 = vpop.permute.xlu0 %972
    %974 = vrot.lane.b32.xlu0 %v933, 96
    %v975 = vpop.permute.xlu0 %974
    %976 = vrot.lane.b32.xlu0 %v934, 96
    %v977 = vpop.permute.xlu0 %976
    %978 = vrot.lane.b32.xlu0 %v935, 96
    %v979 = vpop.permute.xlu0 %978
    %980 = vrot.lane.b32.xlu0 %v936, 96
    %v981 = vpop.permute.xlu0 %980
    %982 = vrot.lane.b32.xlu0 %v937, 96
    %v983 = vpop.permute.xlu0 %982
    %984 = vrot.lane.b32.xlu0 %v938, 96
    %v985 = vpop.permute.xlu0 %984
    %986 = vrot.lane.b32.xlu0 %v939, 96
    %v987 = vpop.permute.xlu0 %986
    %v1004 = vadd.f32 %v460, %v957
    %v1005 = vadd.f32 %v461, %v959
    %v1006 = vadd.f32 %v462, %v961
    %v1007 = vadd.f32 %v463, %v963
    %v1008 = vadd.f32 %v464, %v965
    %v1009 = vadd.f32 %v465, %v967
    %v1010 = vadd.f32 %v466, %v969
    %v1011 = vadd.f32 %v467, %v971
    %v1012 = vadd.f32 %v468, %v973
    %v1013 = vadd.f32 %v469, %v975
    %v1014 = vadd.f32 %v470, %v977
    %v1015 = vadd.f32 %v471, %v979
    %v1016 = vadd.f32 %v472, %v981
    %v1017 = vadd.f32 %v473, %v983
    %v1018 = vadd.f32 %v474, %v985
    %v1019 = vadd.f32 %v475, %v987
    %1036 = vrot.lane.b32.xlu0 %v844, 64
    %v1037 = vpop.permute.xlu0 %1036
    %1038 = vrot.lane.b32.xlu0 %v845, 64
    %v1039 = vpop.permute.xlu0 %1038
    %1040 = vrot.lane.b32.xlu0 %v846, 64
    %v1041 = vpop.permute.xlu0 %1040
    %1042 = vrot.lane.b32.xlu0 %v847, 64
    %v1043 = vpop.permute.xlu0 %1042
    %1044 = vrot.lane.b32.xlu0 %v848, 64
    %v1045 = vpop.permute.xlu0 %1044
    %1046 = vrot.lane.b32.xlu0 %v849, 64
    %v1047 = vpop.permute.xlu0 %1046
    %1048 = vrot.lane.b32.xlu0 %v850, 64
    %v1049 = vpop.permute.xlu0 %1048
    %1050 = vrot.lane.b32.xlu0 %v851, 64
    %v1051 = vpop.permute.xlu0 %1050
    %1052 = vrot.lane.b32.xlu0 %v852, 64
    %v1053 = vpop.permute.xlu0 %1052
    %1054 = vrot.lane.b32.xlu0 %v853, 64
    %v1055 = vpop.permute.xlu0 %1054
    %1056 = vrot.lane.b32.xlu0 %v854, 64
    %v1057 = vpop.permute.xlu0 %1056
    %1058 = vrot.lane.b32.xlu0 %v855, 64
    %v1059 = vpop.permute.xlu0 %1058
    %1060 = vrot.lane.b32.xlu0 %v856, 64
    %v1061 = vpop.permute.xlu0 %1060
    %1062 = vrot.lane.b32.xlu0 %v857, 64
    %v1063 = vpop.permute.xlu0 %1062
    %1064 = vrot.lane.b32.xlu0 %v858, 64
    %v1065 = vpop.permute.xlu0 %1064
    %1066 = vrot.lane.b32.xlu0 %v859, 64
    %v1067 = vpop.permute.xlu0 %1066
    %v1084 = vmul.f32 %v588, %v1037
    %v1085 = vmul.f32 %v589, %v1039
    %v1086 = vmul.f32 %v590, %v1041
    %v1087 = vmul.f32 %v591, %v1043
    %v1088 = vmul.f32 %v592, %v1045
    %v1089 = vmul.f32 %v593, %v1047
    %v1090 = vmul.f32 %v594, %v1049
    %v1091 = vmul.f32 %v595, %v1051
    %v1092 = vmul.f32 %v596, %v1053
    %v1093 = vmul.f32 %v597, %v1055
    %v1094 = vmul.f32 %v598, %v1057
    %v1095 = vmul.f32 %v599, %v1059
    %v1096 = vmul.f32 %v600, %v1061
    %v1097 = vmul.f32 %v601, %v1063
    %v1098 = vmul.f32 %v602, %v1065
    %v1099 = vmul.f32 %v603, %v1067
    %v1100 = vadd.f32 %v1004, %v1084
    %v1101 = vadd.f32 %v1005, %v1085
    %v1102 = vadd.f32 %v1006, %v1086
    %v1103 = vadd.f32 %v1007, %v1087
    %v1104 = vadd.f32 %v1008, %v1088
    %v1105 = vadd.f32 %v1009, %v1089
    %v1106 = vadd.f32 %v1010, %v1090
    %v1107 = vadd.f32 %v1011, %v1091
    %v1108 = vadd.f32 %v1012, %v1092
    %v1109 = vadd.f32 %v1013, %v1093
    %v1110 = vadd.f32 %v1014, %v1094
    %v1111 = vadd.f32 %v1015, %v1095
    %v1112 = vadd.f32 %v1016, %v1096
    %v1113 = vadd.f32 %v1017, %v1097
    %v1114 = vadd.f32 %v1018, %v1098
    %v1115 = vadd.f32 %v1019, %v1099
    %1116 = vrot.lane.b32.xlu0 %v476, 64
    %v1117 = vpop.permute.xlu0 %1116
    %1118 = vrot.lane.b32.xlu0 %v477, 64
    %v1119 = vpop.permute.xlu0 %1118
    %1120 = vrot.lane.b32.xlu0 %v478, 64
    %v1121 = vpop.permute.xlu0 %1120
    %1122 = vrot.lane.b32.xlu0 %v479, 64
    %v1123 = vpop.permute.xlu0 %1122
    %1124 = vrot.lane.b32.xlu0 %v480, 64
    %v1125 = vpop.permute.xlu0 %1124
    %1126 = vrot.lane.b32.xlu0 %v481, 64
    %v1127 = vpop.permute.xlu0 %1126
    %1128 = vrot.lane.b32.xlu0 %v482, 64
    %v1129 = vpop.permute.xlu0 %1128
    %1130 = vrot.lane.b32.xlu0 %v483, 64
    %v1131 = vpop.permute.xlu0 %1130
    %1132 = vrot.lane.b32.xlu0 %v484, 64
    %v1133 = vpop.permute.xlu0 %1132
    %1134 = vrot.lane.b32.xlu0 %v485, 64
    %v1135 = vpop.permute.xlu0 %1134
    %1136 = vrot.lane.b32.xlu0 %v486, 64
    %v1137 = vpop.permute.xlu0 %1136
    %1138 = vrot.lane.b32.xlu0 %v487, 64
    %v1139 = vpop.permute.xlu0 %1138
    %1140 = vrot.lane.b32.xlu0 %v488, 64
    %v1141 = vpop.permute.xlu0 %1140
    %1142 = vrot.lane.b32.xlu0 %v489, 64
    %v1143 = vpop.permute.xlu0 %1142
    %1144 = vrot.lane.b32.xlu0 %v490, 64
    %v1145 = vpop.permute.xlu0 %1144
    %1146 = vrot.lane.b32.xlu0 %v491, 64
    %v1147 = vpop.permute.xlu0 %1146
    %v1164 = vmul.f32 %v1100, %v1117
    %v1165 = vmul.f32 %v1101, %v1119
    %v1166 = vmul.f32 %v1102, %v1121
    %v1167 = vmul.f32 %v1103, %v1123
    %v1168 = vmul.f32 %v1104, %v1125
    %v1169 = vmul.f32 %v1105, %v1127
    %v1170 = vmul.f32 %v1106, %v1129
    %v1171 = vmul.f32 %v1107, %v1131
    %v1172 = vmul.f32 %v1108, %v1133
    %v1173 = vmul.f32 %v1109, %v1135
    %v1174 = vmul.f32 %v1110, %v1137
    %v1175 = vmul.f32 %v1111, %v1139
    %v1176 = vmul.f32 %v1112, %v1141
    %v1177 = vmul.f32 %v1113, %v1143
    %v1178 = vmul.f32 %v1114, %v1145
    %v1179 = vmul.f32 %v1115, %v1147
    %1196 = vrot.lane.b32.xlu0 %v1164, 96
    %v1197 = vpop.permute.xlu0 %1196
    %1198 = vrot.lane.b32.xlu0 %v1165, 96
    %v1199 = vpop.permute.xlu0 %1198
    %1200 = vrot.lane.b32.xlu0 %v1166, 96
    %v1201 = vpop.permute.xlu0 %1200
    %1202 = vrot.lane.b32.xlu0 %v1167, 96
    %v1203 = vpop.permute.xlu0 %1202
    %1204 = vrot.lane.b32.xlu0 %v1168, 96
    %v1205 = vpop.permute.xlu0 %1204
    %1206 = vrot.lane.b32.xlu0 %v1169, 96
    %v1207 = vpop.permute.xlu0 %1206
    %1208 = vrot.lane.b32.xlu0 %v1170, 96
    %v1209 = vpop.permute.xlu0 %1208
    %1210 = vrot.lane.b32.xlu0 %v1171, 96
    %v1211 = vpop.permute.xlu0 %1210
    %1212 = vrot.lane.b32.xlu0 %v1172, 96
    %v1213 = vpop.permute.xlu0 %1212
    %1214 = vrot.lane.b32.xlu0 %v1173, 96
    %v1215 = vpop.permute.xlu0 %1214
    %1216 = vrot.lane.b32.xlu0 %v1174, 96
    %v1217 = vpop.permute.xlu0 %1216
    %1218 = vrot.lane.b32.xlu0 %v1175, 96
    %v1219 = vpop.permute.xlu0 %1218
    %1220 = vrot.lane.b32.xlu0 %v1176, 96
    %v1221 = vpop.permute.xlu0 %1220
    %1222 = vrot.lane.b32.xlu0 %v1177, 96
    %v1223 = vpop.permute.xlu0 %1222
    %1224 = vrot.lane.b32.xlu0 %v1178, 96
    %v1225 = vpop.permute.xlu0 %1224
    %1226 = vrot.lane.b32.xlu0 %v1179, 96
    %v1227 = vpop.permute.xlu0 %1226
    %v1244 = vadd.f32 %v382, %v1197
    %v1245 = vadd.f32 %v387, %v1199
    %v1246 = vadd.f32 %v392, %v1201
    %v1247 = vadd.f32 %v397, %v1203
    %v1248 = vadd.f32 %v402, %v1205
    %v1249 = vadd.f32 %v407, %v1207
    %v1250 = vadd.f32 %v412, %v1209
    %v1251 = vadd.f32 %v417, %v1211
    %v1252 = vadd.f32 %v422, %v1213
    %v1253 = vadd.f32 %v427, %v1215
    %v1254 = vadd.f32 %v432, %v1217
    %v1255 = vadd.f32 %v437, %v1219
    %v1256 = vadd.f32 %v442, %v1221
    %v1257 = vadd.f32 %v447, %v1223
    %v1258 = vadd.f32 %v452, %v1225
    %v1259 = vadd.f32 %v457, %v1227
    %v1260 = vsub.f32 0.0, %v1244
    %v1261 = vsub.f32 0.0, %v1245
    %v1262 = vsub.f32 0.0, %v1246
    %v1263 = vsub.f32 0.0, %v1247
    %v1264 = vsub.f32 0.0, %v1248
    %v1265 = vsub.f32 0.0, %v1249
    %v1266 = vsub.f32 0.0, %v1250
    %v1267 = vsub.f32 0.0, %v1251
    %v1268 = vsub.f32 0.0, %v1252
    %v1269 = vsub.f32 0.0, %v1253
    %v1270 = vsub.f32 0.0, %v1254
    %v1271 = vsub.f32 0.0, %v1255
    %v1272 = vsub.f32 0.0, %v1256
    %v1273 = vsub.f32 0.0, %v1257
    %v1274 = vsub.f32 0.0, %v1258
    %v1275 = vsub.f32 0.0, %v1259
    %v1276 = vmul.f32 %v1260, 1.442695
    %v1277 = vpow.pop %v1276
    %v1278 = vmul.f32 %v1261, 1.442695
    %v1279 = vpow.pop %v1278
    %v1280 = vmul.f32 %v1262, 1.442695
    %v1281 = vpow.pop %v1280
    %v1282 = vmul.f32 %v1263, 1.442695
    %v1283 = vpow.pop %v1282
    %v1284 = vmul.f32 %v1264, 1.442695
    %v1285 = vpow.pop %v1284
    %v1286 = vmul.f32 %v1265, 1.442695
    %v1287 = vpow.pop %v1286
    %v1288 = vmul.f32 %v1266, 1.442695
    %v1289 = vpow.pop %v1288
    %v1290 = vmul.f32 %v1267, 1.442695
    %v1291 = vpow.pop %v1290
    %v1292 = vmul.f32 %v1268, 1.442695
    %v1293 = vpow.pop %v1292
    %v1294 = vmul.f32 %v1269, 1.442695
    %v1295 = vpow.pop %v1294
    %v1296 = vmul.f32 %v1270, 1.442695
    %v1297 = vpow.pop %v1296
    %v1298 = vmul.f32 %v1271, 1.442695
    %v1299 = vpow.pop %v1298
    %v1300 = vmul.f32 %v1272, 1.442695
    %v1301 = vpow.pop %v1300
    %v1302 = vmul.f32 %v1273, 1.442695
    %v1303 = vpow.pop %v1302
    %v1304 = vmul.f32 %v1274, 1.442695
    %v1305 = vpow.pop %v1304
    %v1306 = vmul.f32 %v1275, 1.442695
    %v1307 = vpow.pop %v1306
    %v1308 = vadd.f32 %v1277, 1.0
    %v1309 = vadd.f32 %v1279, 1.0
    %v1310 = vadd.f32 %v1281, 1.0
    %v1311 = vadd.f32 %v1283, 1.0
    %v1312 = vadd.f32 %v1285, 1.0
    %v1313 = vadd.f32 %v1287, 1.0
    %v1314 = vadd.f32 %v1289, 1.0
    %v1315 = vadd.f32 %v1291, 1.0
    %v1316 = vadd.f32 %v1293, 1.0
    %v1317 = vadd.f32 %v1295, 1.0
    %v1318 = vadd.f32 %v1297, 1.0
    %v1319 = vadd.f32 %v1299, 1.0
    %v1320 = vadd.f32 %v1301, 1.0
    %v1321 = vadd.f32 %v1303, 1.0
    %v1322 = vadd.f32 %v1305, 1.0
    %v1323 = vadd.f32 %v1307, 1.0
    %v1324 = vrcp.pop %v1308
    %v1325 = vrcp.pop %v1309
    %v1326 = vrcp.pop %v1310
    %v1327 = vrcp.pop %v1311
    %v1328 = vrcp.pop %v1312
    %v1329 = vrcp.pop %v1313
    %v1330 = vrcp.pop %v1314
    %v1331 = vrcp.pop %v1315
    %v1332 = vrcp.pop %v1316
    %v1333 = vrcp.pop %v1317
    %v1334 = vrcp.pop %v1318
    %v1335 = vrcp.pop %v1319
    %v1336 = vrcp.pop %v1320
    %v1337 = vrcp.pop %v1321
    %v1338 = vrcp.pop %v1322
    %v1339 = vrcp.pop %v1323
    %v1340 = vtanh.pop %v1100
    %v1341 = vtanh.pop %v1101
    %v1342 = vtanh.pop %v1102
    %v1343 = vtanh.pop %v1103
    %v1344 = vtanh.pop %v1104
    %v1345 = vtanh.pop %v1105
    %v1346 = vtanh.pop %v1106
    %v1347 = vtanh.pop %v1107
    %v1348 = vtanh.pop %v1108
    %v1349 = vtanh.pop %v1109
    %v1350 = vtanh.pop %v1110
    %v1351 = vtanh.pop %v1111
    %v1352 = vtanh.pop %v1112
    %v1353 = vtanh.pop %v1113
    %v1354 = vtanh.pop %v1114
    %v1355 = vtanh.pop %v1115
    %1372 = vrot.lane.b32.xlu0 %v1340, 96
    %v1373 = vpop.permute.xlu0 %1372
    %1374 = vrot.lane.b32.xlu0 %v1341, 96
    %v1375 = vpop.permute.xlu0 %1374
    %1376 = vrot.lane.b32.xlu0 %v1342, 96
    %v1377 = vpop.permute.xlu0 %1376
    %1378 = vrot.lane.b32.xlu0 %v1343, 96
    %v1379 = vpop.permute.xlu0 %1378
    %1380 = vrot.lane.b32.xlu0 %v1344, 96
    %v1381 = vpop.permute.xlu0 %1380
    %1382 = vrot.lane.b32.xlu0 %v1345, 96
    %v1383 = vpop.permute.xlu0 %1382
    %1384 = vrot.lane.b32.xlu0 %v1346, 96
    %v1385 = vpop.permute.xlu0 %1384
    %1386 = vrot.lane.b32.xlu0 %v1347, 96
    %v1387 = vpop.permute.xlu0 %1386
    %1388 = vrot.lane.b32.xlu0 %v1348, 96
    %v1389 = vpop.permute.xlu0 %1388
    %1390 = vrot.lane.b32.xlu0 %v1349, 96
    %v1391 = vpop.permute.xlu0 %1390
    %1392 = vrot.lane.b32.xlu0 %v1350, 96
    %v1393 = vpop.permute.xlu0 %1392
    %1394 = vrot.lane.b32.xlu0 %v1351, 96
    %v1395 = vpop.permute.xlu0 %1394
    %1396 = vrot.lane.b32.xlu0 %v1352, 96
    %v1397 = vpop.permute.xlu0 %1396
    %1398 = vrot.lane.b32.xlu0 %v1353, 96
    %v1399 = vpop.permute.xlu0 %1398
    %1400 = vrot.lane.b32.xlu0 %v1354, 96
    %v1401 = vpop.permute.xlu0 %1400
    %1402 = vrot.lane.b32.xlu0 %v1355, 96
    %v1403 = vpop.permute.xlu0 %1402
    %v1420 = vmul.f32 %v1324, %v1373
    %v1421 = vmul.f32 %v1325, %v1375
    %v1422 = vmul.f32 %v1326, %v1377
    %v1423 = vmul.f32 %v1327, %v1379
    %v1424 = vmul.f32 %v1328, %v1381
    %v1425 = vmul.f32 %v1329, %v1383
    %v1426 = vmul.f32 %v1330, %v1385
    %v1427 = vmul.f32 %v1331, %v1387
    %v1428 = vmul.f32 %v1332, %v1389
    %v1429 = vmul.f32 %v1333, %v1391
    %v1430 = vmul.f32 %v1334, %v1393
    %v1431 = vmul.f32 %v1335, %v1395
    %v1432 = vmul.f32 %v1336, %v1397
    %v1433 = vmul.f32 %v1337, %v1399
    %v1434 = vmul.f32 %v1338, %v1401
    %v1435 = vmul.f32 %v1339, %v1403
    %1452 = vrot.lane.b32.xlu0 %v1420, 64
    %v1453 = vpop.permute.xlu0 %1452
    %1454 = vrot.lane.b32.xlu0 %v1421, 64
    %v1455 = vpop.permute.xlu0 %1454
    %1456 = vrot.lane.b32.xlu0 %v1422, 64
    %v1457 = vpop.permute.xlu0 %1456
    %1458 = vrot.lane.b32.xlu0 %v1423, 64
    %v1459 = vpop.permute.xlu0 %1458
    %1460 = vrot.lane.b32.xlu0 %v1424, 64
    %v1461 = vpop.permute.xlu0 %1460
    %1462 = vrot.lane.b32.xlu0 %v1425, 64
    %v1463 = vpop.permute.xlu0 %1462
    %1464 = vrot.lane.b32.xlu0 %v1426, 64
    %v1465 = vpop.permute.xlu0 %1464
    %1466 = vrot.lane.b32.xlu0 %v1427, 64
    %v1467 = vpop.permute.xlu0 %1466
    %1468 = vrot.lane.b32.xlu0 %v1428, 64
    %v1469 = vpop.permute.xlu0 %1468
    %1470 = vrot.lane.b32.xlu0 %v1429, 64
    %v1471 = vpop.permute.xlu0 %1470
    %1472 = vrot.lane.b32.xlu0 %v1430, 64
    %v1473 = vpop.permute.xlu0 %1472
    %1474 = vrot.lane.b32.xlu0 %v1431, 64
    %v1475 = vpop.permute.xlu0 %1474
    %1476 = vrot.lane.b32.xlu0 %v1432, 64
    %v1477 = vpop.permute.xlu0 %1476
    %1478 = vrot.lane.b32.xlu0 %v1433, 64
    %v1479 = vpop.permute.xlu0 %1478
    %1480 = vrot.lane.b32.xlu0 %v1434, 64
    %v1481 = vpop.permute.xlu0 %1480
    %1482 = vrot.lane.b32.xlu0 %v1435, 64
    %v1483 = vpop.permute.xlu0 %1482
    %v1500 = vadd.f32 %v460, %v1453
    %v1501 = vadd.f32 %v461, %v1455
    %v1502 = vadd.f32 %v462, %v1457
    %v1503 = vadd.f32 %v463, %v1459
    %v1504 = vadd.f32 %v464, %v1461
    %v1505 = vadd.f32 %v465, %v1463
    %v1506 = vadd.f32 %v466, %v1465
    %v1507 = vadd.f32 %v467, %v1467
    %v1508 = vadd.f32 %v468, %v1469
    %v1509 = vadd.f32 %v469, %v1471
    %v1510 = vadd.f32 %v470, %v1473
    %v1511 = vadd.f32 %v471, %v1475
    %v1512 = vadd.f32 %v472, %v1477
    %v1513 = vadd.f32 %v473, %v1479
    %v1514 = vadd.f32 %v474, %v1481
    %v1515 = vadd.f32 %v475, %v1483
    %1532 = vrot.lane.b32.xlu0 %v1324, 32
    %v1533 = vpop.permute.xlu0 %1532
    %1534 = vrot.lane.b32.xlu0 %v1325, 32
    %v1535 = vpop.permute.xlu0 %1534
    %1536 = vrot.lane.b32.xlu0 %v1326, 32
    %v1537 = vpop.permute.xlu0 %1536
    %1538 = vrot.lane.b32.xlu0 %v1327, 32
    %v1539 = vpop.permute.xlu0 %1538
    %1540 = vrot.lane.b32.xlu0 %v1328, 32
    %v1541 = vpop.permute.xlu0 %1540
    %1542 = vrot.lane.b32.xlu0 %v1329, 32
    %v1543 = vpop.permute.xlu0 %1542
    %1544 = vrot.lane.b32.xlu0 %v1330, 32
    %v1545 = vpop.permute.xlu0 %1544
    %1546 = vrot.lane.b32.xlu0 %v1331, 32
    %v1547 = vpop.permute.xlu0 %1546
    %1548 = vrot.lane.b32.xlu0 %v1332, 32
    %v1549 = vpop.permute.xlu0 %1548
    %1550 = vrot.lane.b32.xlu0 %v1333, 32
    %v1551 = vpop.permute.xlu0 %1550
    %1552 = vrot.lane.b32.xlu0 %v1334, 32
    %v1553 = vpop.permute.xlu0 %1552
    %1554 = vrot.lane.b32.xlu0 %v1335, 32
    %v1555 = vpop.permute.xlu0 %1554
    %1556 = vrot.lane.b32.xlu0 %v1336, 32
    %v1557 = vpop.permute.xlu0 %1556
    %1558 = vrot.lane.b32.xlu0 %v1337, 32
    %v1559 = vpop.permute.xlu0 %1558
    %1560 = vrot.lane.b32.xlu0 %v1338, 32
    %v1561 = vpop.permute.xlu0 %1560
    %1562 = vrot.lane.b32.xlu0 %v1339, 32
    %v1563 = vpop.permute.xlu0 %1562
    %1596 = vrot.lane.b32.xlu0 %v1100, 64
    %v1597 = vpop.permute.xlu0 %1596
    %1598 = vrot.lane.b32.xlu0 %v1101, 64
    %v1599 = vpop.permute.xlu0 %1598
    %1600 = vrot.lane.b32.xlu0 %v1102, 64
    %v1601 = vpop.permute.xlu0 %1600
    %1602 = vrot.lane.b32.xlu0 %v1103, 64
    %v1603 = vpop.permute.xlu0 %1602
    %1604 = vrot.lane.b32.xlu0 %v1104, 64
    %v1605 = vpop.permute.xlu0 %1604
    %1606 = vrot.lane.b32.xlu0 %v1105, 64
    %v1607 = vpop.permute.xlu0 %1606
    %1608 = vrot.lane.b32.xlu0 %v1106, 64
    %v1609 = vpop.permute.xlu0 %1608
    %1610 = vrot.lane.b32.xlu0 %v1107, 64
    %v1611 = vpop.permute.xlu0 %1610
    %1612 = vrot.lane.b32.xlu0 %v1108, 64
    %v1613 = vpop.permute.xlu0 %1612
    %1614 = vrot.lane.b32.xlu0 %v1109, 64
    %v1615 = vpop.permute.xlu0 %1614
    %1616 = vrot.lane.b32.xlu0 %v1110, 64
    %v1617 = vpop.permute.xlu0 %1616
    %1618 = vrot.lane.b32.xlu0 %v1111, 64
    %v1619 = vpop.permute.xlu0 %1618
    %1620 = vrot.lane.b32.xlu0 %v1112, 64
    %v1621 = vpop.permute.xlu0 %1620
    %1622 = vrot.lane.b32.xlu0 %v1113, 64
    %v1623 = vpop.permute.xlu0 %1622
    %1624 = vrot.lane.b32.xlu0 %v1114, 64
    %v1625 = vpop.permute.xlu0 %1624
    %1626 = vrot.lane.b32.xlu0 %v1115, 64
    %v1627 = vpop.permute.xlu0 %1626
    %vm1644 = vcmask 261120
    %v1645 = vsel %vm1644, %v1533, %v1500
    %v1646 = vsel %vm1644, %v1535, %v1501
    %v1647 = vsel %vm1644, %v1537, %v1502
    %v1648 = vsel %vm1644, %v1539, %v1503
    %v1649 = vsel %vm1644, %v1541, %v1504
    %v1650 = vsel %vm1644, %v1543, %v1505
    %v1651 = vsel %vm1644, %v1545, %v1506
    %v1652 = vsel %vm1644, %v1547, %v1507
    %v1653 = vsel %vm1644, %v1549, %v1508
    %v1654 = vsel %vm1644, %v1551, %v1509
    %v1655 = vsel %vm1644, %v1553, %v1510
    %v1656 = vsel %vm1644, %v1555, %v1511
    %v1657 = vsel %vm1644, %v1557, %v1512
    %v1658 = vsel %vm1644, %v1559, %v1513
    %v1659 = vsel %vm1644, %v1561, %v1514
    %v1660 = vsel %vm1644, %v1563, %v1515
    %vm1661 = vcmask 523264
    %v1662 = vsel %vm1661, %v1645, %v1597
    %v1663 = vsel %vm1661, %v1646, %v1599
    %v1664 = vsel %vm1661, %v1647, %v1601
    %v1665 = vsel %vm1661, %v1648, %v1603
    %v1666 = vsel %vm1661, %v1649, %v1605
    %v1667 = vsel %vm1661, %v1650, %v1607
    %v1668 = vsel %vm1661, %v1651, %v1609
    %v1669 = vsel %vm1661, %v1652, %v1611
    %v1670 = vsel %vm1661, %v1653, %v1613
    %v1671 = vsel %vm1661, %v1654, %v1615
    %v1672 = vsel %vm1661, %v1655, %v1617
    %v1673 = vsel %vm1661, %v1656, %v1619
    %v1674 = vsel %vm1661, %v1657, %v1621
    %v1675 = vsel %vm1661, %v1658, %v1623
    %v1676 = vsel %vm1661, %v1659, %v1625
    %v1677 = vsel %vm1661, %v1660, %v1627
    %vm1678 = vcmask 785408
    %v1679 = vsel %vm1678, %v1662, 0.0
    %v1680 = vsel %vm1678, %v1663, 0.0
    %v1681 = vsel %vm1678, %v1664, 0.0
    %v1682 = vsel %vm1678, %v1665, 0.0
    %v1683 = vsel %vm1678, %v1666, 0.0
    %v1684 = vsel %vm1678, %v1667, 0.0
    %v1685 = vsel %vm1678, %v1668, 0.0
    %v1686 = vsel %vm1678, %v1669, 0.0
    %v1687 = vsel %vm1678, %v1670, 0.0
    %v1688 = vsel %vm1678, %v1671, 0.0
    %v1689 = vsel %vm1678, %v1672, 0.0
    %v1690 = vsel %vm1678, %v1673, 0.0
    %v1691 = vsel %vm1678, %v1674, 0.0
    %v1692 = vsel %vm1678, %v1675, 0.0
    %v1693 = vsel %vm1678, %v1676, 0.0
    %v1694 = vsel %vm1678, %v1677, 0.0
    %1695 = vst [vmem:[#allocation2] sm:$0xff] %v1679
    %1696 = vst [vmem:[#allocation2 + $0x8] sm:$0xff] %v1680
    %1697 = vst [vmem:[#allocation2 + $0x10] sm:$0xff] %v1681
    %1698 = vst [vmem:[#allocation2 + $0x18] sm:$0xff] %v1682
    %1699 = vst [vmem:[#allocation2 + $0x20] sm:$0xff] %v1683
    %1700 = vst [vmem:[#allocation2 + $0x28] sm:$0xff] %v1684
    %1701 = vst [vmem:[#allocation2 + $0x30] sm:$0xff] %v1685
    %1702 = vst [vmem:[#allocation2 + $0x38] sm:$0xff] %v1686
    %1703 = vst [vmem:[#allocation2 + $0x40] sm:$0xff] %v1687
    %1704 = vst [vmem:[#allocation2 + $0x48] sm:$0xff] %v1688
    %1705 = vst [vmem:[#allocation2 + $0x50] sm:$0xff] %v1689
    %1706 = vst [vmem:[#allocation2 + $0x58] sm:$0xff] %v1690
    %1707 = vst [vmem:[#allocation2 + $0x60] sm:$0xff] %v1691
    %1708 = vst [vmem:[#allocation2 + $0x68] sm:$0xff] %v1692
    %1709 = vst [vmem:[#allocation2 + $0x70] sm:$0xff] %v1693
    %1710 = vst [vmem:[#allocation2 + $0x78] sm:$0xff] %v1694
    // Predicated region
    $region22: #{tpu_custom_call.1} parent=1 // pred_check
      _
    $region23: #{tpu_custom_call.1} parent=1 // pred_check_branch
      %1712 = sbr.rel (0) target = $region25
    $region24: #{tpu_custom_call.1} parent=1 // pred_region
      %s1714 = ssub.s32 2048, 2048
      %1715 = vsyncadd [#allocation3], %s1714
      %s1716 = sshll.u32 [#allocation2], 4
      %s1717 = int_to_ptr.vmem [resolvable:$true] %s1716
      %1722 = dma.vmem_to_hbm [thread:$0]  %s1717, 2048, %s5, [#allocation3], 128, 128, 8
    $region25: #{tpu_custom_call.1} parent=1 // pred_fallthru
      _
    // Predicated region
    $region26: #{tpu_custom_call.1} parent=1 // pred_check
      _
    $region27: #{tpu_custom_call.1} parent=1 // pred_check_branch
      %1724 = sbr.rel (0) target = $region29
    $region28: #{tpu_custom_call.1} parent=1 // pred_region
      %1725 = dma.done [#allocation3], 2048
    $region29: #{tpu_custom_call.1} parent=1 // pred_fallthru
      _
    %1726 = vsyncpa [#allocation3], 1

</llo_original>
